<compile_context>
chip_gen: v7x
topology: tpu7x:2x2x1
jax: 0.10.0
libtpu: 0.0.40
codegen_flags: <defaults>
</compile_context>

<pallas_src>
import functools

import jax
import jax.numpy as jnp
from jax.experimental import pallas as pl
from jax.experimental.pallas import tpu as pltpu

K = 7          # kernel_size
P = 3          # padding (kernel_size == 7 -> padding 3)


def _round_up(v, m):
    return (v + m - 1) // m * m


def _spatial_attention_kernel(w_ref, x_ref, o_ref, red_ref, pad_ref, *, C, H, W):
    """Grid = (batch, channel_chunk).

    w_ref  : SMEM f32[2*K*K]            flattened conv weight (1, 2, K, K)
    x_ref  : VMEM (1, CC, H*W)          one channel chunk of one image (flat)
    o_ref  : VMEM (1, 1, H, W)          sigmoid(conv(...)) output
    red_ref: VMEM f32[2, H*W]           running [channel sum; channel max]
    pad_ref: VMEM f32[2, Hp_al, Wl]     zero-padded 2-D [mean; max] for the conv
    """
    ci = pl.program_id(1)
    nc = pl.num_programs(1)
    HW = H * W

    # Dense (c_chunk sublanes x HW lanes) reduction over the channel chunk.
    x = x_ref[0].astype(jnp.float32)                       # (CC, HW)
    part_sum = jnp.sum(x, axis=0, keepdims=True)           # (1, HW)
    part_max = jnp.max(x, axis=0, keepdims=True)           # (1, HW)

    # ---- running channel reduction across the (arbitrary) chunk axis ----
    @pl.when(ci == 0)
    def _init():
        # Zero the padded conv buffer once per image; only its interior is
        # rewritten at finalize, the border stays zero.
        pad_ref[...] = jnp.zeros_like(pad_ref)
        red_ref[0:1, :] = part_sum
        red_ref[1:2, :] = part_max

    @pl.when(ci > 0)
    def _accum():
        red_ref[0:1, :] = red_ref[0:1, :] + part_sum
        red_ref[1:2, :] = jnp.maximum(red_ref[1:2, :], part_max)

    # ---- last chunk: scatter flat mean/max to 2-D, 7x7 conv, sigmoid ----
    @pl.when(ci == nc - 1)
    def _finalize():
        # sum -> mean, in place (last use of the sum row).
        red_ref[0:1, :] = red_ref[0:1, :] * jnp.float32(1.0 / C)

        # Flat (HW,) -> padded 2-D (H, W) interior, one static row copy per
        # row.  2*H tiny ops once per image; avoids an in-kernel reshape.
        for h in range(H):
            off = h * W
            pad_ref[0, P + h, P:P + W] = red_ref[0, off:off + W]
            pad_ref[1, P + h, P:P + W] = red_ref[1, off:off + W]

        # 14 slab loads total (one per (c, ky), full lane width), 7 independent
        # per-kx partial accumulators (ILP; avoids a 98-long mul->add chain on
        # chips without f32 FMA).
        partials = [None] * K
        for c in range(2):
            for ky in range(K):
                slab = pad_ref[c, ky:ky + H, :]            # (H, Wl), loaded once
                for kx in range(K):
                    wv = w_ref[(c * K + ky) * K + kx]      # scalar from SMEM
                    term = slab * wv
                    partials[kx] = term if partials[kx] is None \
                        else partials[kx] + term

        # Apply the kx lane shift once per partial (static slices -> XLU work,
        # hidden under the VALU mul/add), then combine.
        acc = partials[0][:, 0:W]
        for kx in range(1, K):
            acc = acc + partials[kx][:, kx:kx + W]

        o_ref[0, 0] = jax.nn.sigmoid(acc).astype(o_ref.dtype)


def spatial_attention(x, weight, *, c_chunk=None):
    """x: (N, C, H, W); weight: (1, 2, K, K). Returns (N, 1, H, W)."""
    N, C, H, W = x.shape
    assert weight.shape == (1, 2, K, K)
    HW = H * W
    itemsize = x.dtype.itemsize

    # Flat spatial view (free metadata reshape of a contiguous array) -> the
    # reduction block is lane-dense and its DMA rows are wide.
    x_flat = x.reshape(N, C, HW)
    w_flat = weight.reshape(-1).astype(jnp.float32)        # (2*K*K,) in SMEM

    # Channel-chunk the reduction so the (double-buffered) input block stays
    # small.  c_chunk must be a multiple of 8 (or the full C) because it is
    # now the second-minor dim of the input block.
    if c_chunk is None:
        budget = 4 << 20                                   # bytes per input block
        if C * HW * itemsize <= budget:
            c_chunk = C
        else:
            divs8 = [d for d in range(8, C, 8) if C % d == 0]
            fitting = [d for d in divs8 if d * HW * itemsize <= budget]
            if fitting:
                c_chunk = max(fitting)
            elif divs8:
                c_chunk = min(divs8)                       # soft budget exceeded
            else:
                c_chunk = C                                # no legal divisor
    assert C % c_chunk == 0 and (c_chunk == C or c_chunk % 8 == 0)
    nc = C // c_chunk

    # Padded 2-D conv scratch, tile-aligned allocation.
    hp_al = _round_up(H + 2 * P, 8)
    wl = _round_up(W + 2 * P, 128)

    # Explicit VMEM budget: 2x (double-buffered) input + output blocks +
    # scratch (allocation-padded) + headroom, clamped to a v7x-safe range.
    in_block = _round_up(c_chunk, 8) * _round_up(HW, 128) * itemsize
    out_block = _round_up(H, 8) * _round_up(W, 128) * itemsize
    scratch_bytes = (8 * _round_up(HW, 128) + 2 * hp_al * wl) * 4
    vmem_limit = int(min(max(2 * (in_block + out_block) + scratch_bytes
                             + (4 << 20), 16 << 20), 64 << 20))

    kernel = functools.partial(_spatial_attention_kernel, C=C, H=H, W=W)

    return pl.pallas_call(
        kernel,
        out_shape=jax.ShapeDtypeStruct((N, 1, H, W), x.dtype),
        grid=(N, nc),
        in_specs=[
            pl.BlockSpec(memory_space=pltpu.SMEM),                     # weight
            pl.BlockSpec((1, c_chunk, HW), lambda n, c: (n, c, 0)),    # x (flat)
        ],
        out_specs=pl.BlockSpec((1, 1, H, W), lambda n, c: (n, 0, 0, 0)),
        scratch_shapes=[
            pltpu.VMEM((2, HW), jnp.float32),         # running [sum; max], flat
            pltpu.VMEM((2, hp_al, wl), jnp.float32),  # zero-padded [mean; max]
        ],
        compiler_params=pltpu.CompilerParams(
            dimension_semantics=("parallel", "arbitrary"),
            vmem_limit_bytes=vmem_limit,
        ),
    )(w_flat, x_flat)


def spatial_attention_ref(x, weight):
    """Pure-JAX reference (mirrors the PyTorch forward) for validation."""
    xf = x.astype(jnp.float32)
    avg = jnp.mean(xf, axis=1, keepdims=True)
    mx = jnp.max(xf, axis=1, keepdims=True)
    cat = jnp.concatenate([avg, mx], axis=1)               # (N, 2, H, W)
    y = jax.lax.conv_general_dilated(
        cat, weight.astype(jnp.float32),
        window_strides=(1, 1), padding=((P, P), (P, P)),
        dimension_numbers=("NCHW", "OIHW", "NCHW"))
    return jax.nn.sigmoid(y).astype(x.dtype)


if __name__ == "__main__":
    key = jax.random.PRNGKey(0)
    kx_key, kw_key, kx2_key = jax.random.split(key, 3)

    N, C, H, W = 2, 4, 16, 16
    x = jax.random.normal(kx_key, (N, C, H, W), dtype=jnp.float32)

    # xavier_normal_(gain=0.02) for weight (out=1, in=2, 7, 7)
    fan_in, fan_out = 2 * K * K, 1 * K * K
    std = 0.02 * (2.0 / (fan_in + fan_out)) ** 0.5
    weight = std * jax.random.normal(kw_key, (1, 2, K, K), dtype=jnp.float32)

    out = jax.block_until_ready(spatial_attention(x, weight))
    ref = spatial_attention_ref(x, weight)
    assert out.shape == (N, 1, H, W)
    assert jnp.allclose(out, ref, atol=1e-5, rtol=1e-5), "mismatch vs reference"

    # Also exercise the multi-chunk running sum/max path (nc = 2).
    x2 = jax.random.normal(kx2_key, (2, 16, 16, 16), dtype=jnp.float32)
    out2 = jax.block_until_ready(spatial_attention(x2, weight, c_chunk=8))
    ref2 = spatial_attention_ref(x2, weight)
    assert jnp.allclose(out2, ref2, atol=1e-5, rtol=1e-5), "mismatch (chunked)"

    print("KERNEL_OK")
</pallas_src>

<mosaic_0001>
module attributes {stable_mosaic.version = 11 : i64} {
  func.func @_spatial_attention_kernel(%arg0: i32, %arg1: i32, %arg2: memref<98xf32, #tpu.memory_space<smem>>, %arg3: memref<1x4x256xf32, #tpu.memory_space<vmem>>, %arg4: memref<1x1x16x16xf32, #tpu.memory_space<vmem>>, %arg5: memref<2x256xf32, #tpu.memory_space<vmem>>, %arg6: memref<2x24x128xf32, #tpu.memory_space<vmem>>) attributes {dimension_semantics = [#tpu.dimension_semantics<parallel>, #tpu.dimension_semantics<arbitrary>], iteration_bounds = array<i64: 2, 1>, scalar_prefetch = 0 : i64, scratch_operands = 2 : i64, tpu.core_type = #tpu.core_type<tc>, window_params = [{transform_indices = @transform_0, window_bounds = array<i64: 98>}, {transform_indices = @transform_1, window_bounds = array<i64: 1, 4, 256>}, {transform_indices = @transform_2, window_bounds = array<i64: 1, 1, 16, 16>}]} {
    %c0 = arith.constant 0 : index
    %c0_0 = arith.constant 0 : index
    %c0_1 = arith.constant 0 : index
    %0 = vector.load %arg3[%c0, %c0_0, %c0_1] : memref<1x4x256xf32, #tpu.memory_space<vmem>>, vector<1x4x256xf32>
    %1 = vector.shape_cast %0 : vector<1x4x256xf32> to vector<4x256xf32>
    %cst = arith.constant dense<0.000000e+00> : vector<256xf32>
    %2 = vector.multi_reduction <add>, %1, %cst [0] : vector<4x256xf32> to vector<256xf32>
    %3 = vector.shape_cast %2 : vector<256xf32> to vector<1x256xf32>
    %cst_2 = arith.constant dense<0xFF800000> : vector<256xf32>
    %4 = vector.multi_reduction <maximumf>, %1, %cst_2 [0] : vector<4x256xf32> to vector<256xf32>
    %5 = vector.shape_cast %4 : vector<256xf32> to vector<1x256xf32>
    %c0_i32 = arith.constant 0 : i32
    %6 = arith.cmpi eq, %arg1, %c0_i32 : i32
    %7 = arith.extui %6 : i1 to i32
    %c0_i32_3 = arith.constant 0 : i32
    %8 = arith.cmpi ne, %7, %c0_i32_3 : i32
    scf.if %8 {
      %cst_8 = arith.constant 0.000000e+00 : f32
      %15 = vector.broadcast %cst_8 : f32 to vector<2x24x128xf32>
      %c0_9 = arith.constant 0 : index
      %c0_10 = arith.constant 0 : index
      %c0_11 = arith.constant 0 : index
      %16 = vector.load %arg6[%c0_9, %c0_10, %c0_11] : memref<2x24x128xf32, #tpu.memory_space<vmem>>, vector<2x24x128xf32>
      tpu.vector_store %arg6[%c0_9, %c0_10, %c0_11], %15 {strides = array<i32>} : memref<2x24x128xf32, #tpu.memory_space<vmem>>, vector<2x24x128xf32>,
      %c0_12 = arith.constant 0 : index
      %c0_13 = arith.constant 0 : index
      %17 = vector.load %arg5[%c0_12, %c0_13] : memref<2x256xf32, #tpu.memory_space<vmem>>, vector<1x256xf32>
      tpu.vector_store %arg5[%c0_12, %c0_13], %3 {strides = array<i32>} : memref<2x256xf32, #tpu.memory_space<vmem>>, vector<1x256xf32>,
      %c1 = arith.constant 1 : index
      %c0_14 = arith.constant 0 : index
      %18 = vector.load %arg5[%c1, %c0_14] : memref<2x256xf32, #tpu.memory_space<vmem>>, vector<1x256xf32>
      tpu.vector_store %arg5[%c1, %c0_14], %5 {strides = array<i32>} : memref<2x256xf32, #tpu.memory_space<vmem>>, vector<1x256xf32>,
    } else {
    }
    %c0_i32_4 = arith.constant 0 : i32
    %9 = arith.cmpi sgt, %arg1, %c0_i32_4 : i32
    %10 = arith.extui %9 : i1 to i32
    %c0_i32_5 = arith.constant 0 : i32
    %11 = arith.cmpi ne, %10, %c0_i32_5 : i32
    scf.if %11 {
      %c0_8 = arith.constant 0 : index
      %c0_9 = arith.constant 0 : index
      %15 = vector.load %arg5[%c0_8, %c0_9] : memref<2x256xf32, #tpu.memory_space<vmem>>, vector<1x256xf32>
      %16 = arith.addf %15, %3 : vector<1x256xf32>
      %c0_10 = arith.constant 0 : index
      %c0_11 = arith.constant 0 : index
      %17 = vector.load %arg5[%c0_10, %c0_11] : memref<2x256xf32, #tpu.memory_space<vmem>>, vector<1x256xf32>
      tpu.vector_store %arg5[%c0_10, %c0_11], %16 {strides = array<i32>} : memref<2x256xf32, #tpu.memory_space<vmem>>, vector<1x256xf32>,
      %c1 = arith.constant 1 : index
      %c0_12 = arith.constant 0 : index
      %18 = vector.load %arg5[%c1, %c0_12] : memref<2x256xf32, #tpu.memory_space<vmem>>, vector<1x256xf32>
      %19 = arith.maximumf %18, %5 : vector<1x256xf32>
      %c1_13 = arith.constant 1 : index
      %c0_14 = arith.constant 0 : index
      %20 = vector.load %arg5[%c1_13, %c0_14] : memref<2x256xf32, #tpu.memory_space<vmem>>, vector<1x256xf32>
      tpu.vector_store %arg5[%c1_13, %c0_14], %19 {strides = array<i32>} : memref<2x256xf32, #tpu.memory_space<vmem>>, vector<1x256xf32>,
    } else {
    }
    %c0_i32_6 = arith.constant 0 : i32
    %12 = arith.cmpi eq, %arg1, %c0_i32_6 : i32
    %13 = arith.extui %12 : i1 to i32
    %c0_i32_7 = arith.constant 0 : i32
    %14 = arith.cmpi ne, %13, %c0_i32_7 : i32
    scf.if %14 {
      %c0_8 = arith.constant 0 : index
      %c0_9 = arith.constant 0 : index
      %15 = vector.load %arg5[%c0_8, %c0_9] : memref<2x256xf32, #tpu.memory_space<vmem>>, vector<1x256xf32>
      %cst_10 = arith.constant 2.500000e-01 : f32
      %16 = vector.broadcast %cst_10 : f32 to vector<1x256xf32>
      %17 = arith.mulf %15, %16 : vector<1x256xf32>
      %c0_11 = arith.constant 0 : index
      %c0_12 = arith.constant 0 : index
      %18 = vector.load %arg5[%c0_11, %c0_12] : memref<2x256xf32, #tpu.memory_space<vmem>>, vector<1x256xf32>
      tpu.vector_store %arg5[%c0_11, %c0_12], %17 {strides = array<i32>} : memref<2x256xf32, #tpu.memory_space<vmem>>, vector<1x256xf32>,
      %c0_13 = arith.constant 0 : index
      %c0_14 = arith.constant 0 : index
      %19 = vector.load %arg5[%c0_13, %c0_14] : memref<2x256xf32, #tpu.memory_space<vmem>>, vector<1x16xf32>
      %20 = vector.shape_cast %19 : vector<1x16xf32> to vector<16xf32>
      %c0_15 = arith.constant 0 : index
      %c3 = arith.constant 3 : index
      %c3_16 = arith.constant 3 : index
      %21 = vector.load %arg6[%c0_15, %c3, %c3_16] : memref<2x24x128xf32, #tpu.memory_space<vmem>>, vector<1x1x16xf32>
      %22 = vector.shape_cast %21 : vector<1x1x16xf32> to vector<16xf32>
      %23 = vector.shape_cast %20 : vector<16xf32> to vector<1x1x16xf32>
      tpu.vector_store %arg6[%c0_15, %c3, %c3_16], %23 {strides = array<i32>} : memref<2x24x128xf32, #tpu.memory_space<vmem>>, vector<1x1x16xf32>,
      %c1 = arith.constant 1 : index
      %c0_17 = arith.constant 0 : index
      %24 = vector.load %arg5[%c1, %c0_17] : memref<2x256xf32, #tpu.memory_space<vmem>>, vector<1x16xf32>
      %25 = vector.shape_cast %24 : vector<1x16xf32> to vector<16xf32>
      %c1_18 = arith.constant 1 : index
      %c3_19 = arith.constant 3 : index
      %c3_20 = arith.constant 3 : index
      %26 = vector.load %arg6[%c1_18, %c3_19, %c3_20] : memref<2x24x128xf32, #tpu.memory_space<vmem>>, vector<1x1x16xf32>
      %27 = vector.shape_cast %26 : vector<1x1x16xf32> to vector<16xf32>
      %28 = vector.shape_cast %25 : vector<16xf32> to vector<1x1x16xf32>
      tpu.vector_store %arg6[%c1_18, %c3_19, %c3_20], %28 {strides = array<i32>} : memref<2x24x128xf32, #tpu.memory_space<vmem>>, vector<1x1x16xf32>,
      %c0_21 = arith.constant 0 : index
      %c16 = arith.constant 16 : index
      %29 = vector.load %arg5[%c0_21, %c16] : memref<2x256xf32, #tpu.memory_space<vmem>>, vector<1x16xf32>
      %30 = vector.shape_cast %29 : vector<1x16xf32> to vector<16xf32>
      %c0_22 = arith.constant 0 : index
      %c4 = arith.constant 4 : index
      %c3_23 = arith.constant 3 : index
      %31 = vector.load %arg6[%c0_22, %c4, %c3_23] : memref<2x24x128xf32, #tpu.memory_space<vmem>>, vector<1x1x16xf32>
      %32 = vector.shape_cast %31 : vector<1x1x16xf32> to vector<16xf32>
      %33 = vector.shape_cast %30 : vector<16xf32> to vector<1x1x16xf32>
      tpu.vector_store %arg6[%c0_22, %c4, %c3_23], %33 {strides = array<i32>} : memref<2x24x128xf32, #tpu.memory_space<vmem>>, vector<1x1x16xf32>,
      %c1_24 = arith.constant 1 : index
      %c16_25 = arith.constant 16 : index
      %34 = vector.load %arg5[%c1_24, %c16_25] : memref<2x256xf32, #tpu.memory_space<vmem>>, vector<1x16xf32>
      %35 = vector.shape_cast %34 : vector<1x16xf32> to vector<16xf32>
      %c1_26 = arith.constant 1 : index
      %c4_27 = arith.constant 4 : index
      %c3_28 = arith.constant 3 : index
      %36 = vector.load %arg6[%c1_26, %c4_27, %c3_28] : memref<2x24x128xf32, #tpu.memory_space<vmem>>, vector<1x1x16xf32>
      %37 = vector.shape_cast %36 : vector<1x1x16xf32> to vector<16xf32>
      %38 = vector.shape_cast %35 : vector<16xf32> to vector<1x1x16xf32>
      tpu.vector_store %arg6[%c1_26, %c4_27, %c3_28], %38 {strides = array<i32>} : memref<2x24x128xf32, #tpu.memory_space<vmem>>, vector<1x1x16xf32>,
      %c0_29 = arith.constant 0 : index
      %c32 = arith.constant 32 : index
      %39 = vector.load %arg5[%c0_29, %c32] : memref<2x256xf32, #tpu.memory_space<vmem>>, vector<1x16xf32>
      %40 = vector.shape_cast %39 : vector<1x16xf32> to vector<16xf32>
      %c0_30 = arith.constant 0 : index
      %c5 = arith.constant 5 : index
      %c3_31 = arith.constant 3 : index
      %41 = vector.load %arg6[%c0_30, %c5, %c3_31] : memref<2x24x128xf32, #tpu.memory_space<vmem>>, vector<1x1x16xf32>
      %42 = vector.shape_cast %41 : vector<1x1x16xf32> to vector<16xf32>
      %43 = vector.shape_cast %40 : vector<16xf32> to vector<1x1x16xf32>
      tpu.vector_store %arg6[%c0_30, %c5, %c3_31], %43 {strides = array<i32>} : memref<2x24x128xf32, #tpu.memory_space<vmem>>, vector<1x1x16xf32>,
      %c1_32 = arith.constant 1 : index
      %c32_33 = arith.constant 32 : index
      %44 = vector.load %arg5[%c1_32, %c32_33] : memref<2x256xf32, #tpu.memory_space<vmem>>, vector<1x16xf32>
      %45 = vector.shape_cast %44 : vector<1x16xf32> to vector<16xf32>
      %c1_34 = arith.constant 1 : index
      %c5_35 = arith.constant 5 : index
      %c3_36 = arith.constant 3 : index
      %46 = vector.load %arg6[%c1_34, %c5_35, %c3_36] : memref<2x24x128xf32, #tpu.memory_space<vmem>>, vector<1x1x16xf32>
      %47 = vector.shape_cast %46 : vector<1x1x16xf32> to vector<16xf32>
      %48 = vector.shape_cast %45 : vector<16xf32> to vector<1x1x16xf32>
      tpu.vector_store %arg6[%c1_34, %c5_35, %c3_36], %48 {strides = array<i32>} : memref<2x24x128xf32, #tpu.memory_space<vmem>>, vector<1x1x16xf32>,
      %c0_37 = arith.constant 0 : index
      %c48 = arith.constant 48 : index
      %49 = vector.load %arg5[%c0_37, %c48] : memref<2x256xf32, #tpu.memory_space<vmem>>, vector<1x16xf32>
      %50 = vector.shape_cast %49 : vector<1x16xf32> to vector<16xf32>
      %c0_38 = arith.constant 0 : index
      %c6 = arith.constant 6 : index
      %c3_39 = arith.constant 3 : index
      %51 = vector.load %arg6[%c0_38, %c6, %c3_39] : memref<2x24x128xf32, #tpu.memory_space<vmem>>, vector<1x1x16xf32>
      %52 = vector.shape_cast %51 : vector<1x1x16xf32> to vector<16xf32>
      %53 = vector.shape_cast %50 : vector<16xf32> to vector<1x1x16xf32>
      tpu.vector_store %arg6[%c0_38, %c6, %c3_39], %53 {strides = array<i32>} : memref<2x24x128xf32, #tpu.memory_space<vmem>>, vector<1x1x16xf32>,
      %c1_40 = arith.constant 1 : index
      %c48_41 = arith.constant 48 : index
      %54 = vector.load %arg5[%c1_40, %c48_41] : memref<2x256xf32, #tpu.memory_space<vmem>>, vector<1x16xf32>
      %55 = vector.shape_cast %54 : vector<1x16xf32> to vector<16xf32>
      %c1_42 = arith.constant 1 : index
      %c6_43 = arith.constant 6 : index
      %c3_44 = arith.constant 3 : index
      %56 = vector.load %arg6[%c1_42, %c6_43, %c3_44] : memref<2x24x128xf32, #tpu.memory_space<vmem>>, vector<1x1x16xf32>
      %57 = vector.shape_cast %56 : vector<1x1x16xf32> to vector<16xf32>
      %58 = vector.shape_cast %55 : vector<16xf32> to vector<1x1x16xf32>
      tpu.vector_store %arg6[%c1_42, %c6_43, %c3_44], %58 {strides = array<i32>} : memref<2x24x128xf32, #tpu.memory_space<vmem>>, vector<1x1x16xf32>,
      %c0_45 = arith.constant 0 : index
      %c64 = arith.constant 64 : index
      %59 = vector.load %arg5[%c0_45, %c64] : memref<2x256xf32, #tpu.memory_space<vmem>>, vector<1x16xf32>
      %60 = vector.shape_cast %59 : vector<1x16xf32> to vector<16xf32>
      %c0_46 = arith.constant 0 : index
      %c7 = arith.constant 7 : index
      %c3_47 = arith.constant 3 : index
      %61 = vector.load %arg6[%c0_46, %c7, %c3_47] : memref<2x24x128xf32, #tpu.memory_space<vmem>>, vector<1x1x16xf32>
      %62 = vector.shape_cast %61 : vector<1x1x16xf32> to vector<16xf32>
      %63 = vector.shape_cast %60 : vector<16xf32> to vector<1x1x16xf32>
      tpu.vector_store %arg6[%c0_46, %c7, %c3_47], %63 {strides = array<i32>} : memref<2x24x128xf32, #tpu.memory_space<vmem>>, vector<1x1x16xf32>,
      %c1_48 = arith.constant 1 : index
      %c64_49 = arith.constant 64 : index
      %64 = vector.load %arg5[%c1_48, %c64_49] : memref<2x256xf32, #tpu.memory_space<vmem>>, vector<1x16xf32>
      %65 = vector.shape_cast %64 : vector<1x16xf32> to vector<16xf32>
      %c1_50 = arith.constant 1 : index
      %c7_51 = arith.constant 7 : index
      %c3_52 = arith.constant 3 : index
      %66 = vector.load %arg6[%c1_50, %c7_51, %c3_52] : memref<2x24x128xf32, #tpu.memory_space<vmem>>, vector<1x1x16xf32>
      %67 = vector.shape_cast %66 : vector<1x1x16xf32> to vector<16xf32>
      %68 = vector.shape_cast %65 : vector<16xf32> to vector<1x1x16xf32>
      tpu.vector_store %arg6[%c1_50, %c7_51, %c3_52], %68 {strides = array<i32>} : memref<2x24x128xf32, #tpu.memory_space<vmem>>, vector<1x1x16xf32>,
      %c0_53 = arith.constant 0 : index
      %c80 = arith.constant 80 : index
      %69 = vector.load %arg5[%c0_53, %c80] : memref<2x256xf32, #tpu.memory_space<vmem>>, vector<1x16xf32>
      %70 = vector.shape_cast %69 : vector<1x16xf32> to vector<16xf32>
      %c0_54 = arith.constant 0 : index
      %c8 = arith.constant 8 : index
      %c3_55 = arith.constant 3 : index
      %71 = vector.load %arg6[%c0_54, %c8, %c3_55] : memref<2x24x128xf32, #tpu.memory_space<vmem>>, vector<1x1x16xf32>
      %72 = vector.shape_cast %71 : vector<1x1x16xf32> to vector<16xf32>
      %73 = vector.shape_cast %70 : vector<16xf32> to vector<1x1x16xf32>
      tpu.vector_store %arg6[%c0_54, %c8, %c3_55], %73 {strides = array<i32>} : memref<2x24x128xf32, #tpu.memory_space<vmem>>, vector<1x1x16xf32>,
      %c1_56 = arith.constant 1 : index
      %c80_57 = arith.constant 80 : index
      %74 = vector.load %arg5[%c1_56, %c80_57] : memref<2x256xf32, #tpu.memory_space<vmem>>, vector<1x16xf32>
      %75 = vector.shape_cast %74 : vector<1x16xf32> to vector<16xf32>
      %c1_58 = arith.constant 1 : index
      %c8_59 = arith.constant 8 : index
      %c3_60 = arith.constant 3 : index
      %76 = vector.load %arg6[%c1_58, %c8_59, %c3_60] : memref<2x24x128xf32, #tpu.memory_space<vmem>>, vector<1x1x16xf32>
      %77 = vector.shape_cast %76 : vector<1x1x16xf32> to vector<16xf32>
      %78 = vector.shape_cast %75 : vector<16xf32> to vector<1x1x16xf32>
      tpu.vector_store %arg6[%c1_58, %c8_59, %c3_60], %78 {strides = array<i32>} : memref<2x24x128xf32, #tpu.memory_space<vmem>>, vector<1x1x16xf32>,
      %c0_61 = arith.constant 0 : index
      %c96 = arith.constant 96 : index
      %79 = vector.load %arg5[%c0_61, %c96] : memref<2x256xf32, #tpu.memory_space<vmem>>, vector<1x16xf32>
      %80 = vector.shape_cast %79 : vector<1x16xf32> to vector<16xf32>
      %c0_62 = arith.constant 0 : index
      %c9 = arith.constant 9 : index
      %c3_63 = arith.constant 3 : index
      %81 = vector.load %arg6[%c0_62, %c9, %c3_63] : memref<2x24x128xf32, #tpu.memory_space<vmem>>, vector<1x1x16xf32>
      %82 = vector.shape_cast %81 : vector<1x1x16xf32> to vector<16xf32>
      %83 = vector.shape_cast %80 : vector<16xf32> to vector<1x1x16xf32>
      tpu.vector_store %arg6[%c0_62, %c9, %c3_63], %83 {strides = array<i32>} : memref<2x24x128xf32, #tpu.memory_space<vmem>>, vector<1x1x16xf32>,
      %c1_64 = arith.constant 1 : index
      %c96_65 = arith.constant 96 : index
      %84 = vector.load %arg5[%c1_64, %c96_65] : memref<2x256xf32, #tpu.memory_space<vmem>>, vector<1x16xf32>
      %85 = vector.shape_cast %84 : vector<1x16xf32> to vector<16xf32>
      %c1_66 = arith.constant 1 : index
      %c9_67 = arith.constant 9 : index
      %c3_68 = arith.constant 3 : index
      %86 = vector.load %arg6[%c1_66, %c9_67, %c3_68] : memref<2x24x128xf32, #tpu.memory_space<vmem>>, vector<1x1x16xf32>
      %87 = vector.shape_cast %86 : vector<1x1x16xf32> to vector<16xf32>
      %88 = vector.shape_cast %85 : vector<16xf32> to vector<1x1x16xf32>
      tpu.vector_store %arg6[%c1_66, %c9_67, %c3_68], %88 {strides = array<i32>} : memref<2x24x128xf32, #tpu.memory_space<vmem>>, vector<1x1x16xf32>,
      %c0_69 = arith.constant 0 : index
      %c112 = arith.constant 112 : index
      %89 = vector.load %arg5[%c0_69, %c112] : memref<2x256xf32, #tpu.memory_space<vmem>>, vector<1x16xf32>
      %90 = vector.shape_cast %89 : vector<1x16xf32> to vector<16xf32>
      %c0_70 = arith.constant 0 : index
      %c10 = arith.constant 10 : index
      %c3_71 = arith.constant 3 : index
      %91 = vector.load %arg6[%c0_70, %c10, %c3_71] : memref<2x24x128xf32, #tpu.memory_space<vmem>>, vector<1x1x16xf32>
      %92 = vector.shape_cast %91 : vector<1x1x16xf32> to vector<16xf32>
      %93 = vector.shape_cast %90 : vector<16xf32> to vector<1x1x16xf32>
      tpu.vector_store %arg6[%c0_70, %c10, %c3_71], %93 {strides = array<i32>} : memref<2x24x128xf32, #tpu.memory_space<vmem>>, vector<1x1x16xf32>,
      %c1_72 = arith.constant 1 : index
      %c112_73 = arith.constant 112 : index
      %94 = vector.load %arg5[%c1_72, %c112_73] : memref<2x256xf32, #tpu.memory_space<vmem>>, vector<1x16xf32>
      %95 = vector.shape_cast %94 : vector<1x16xf32> to vector<16xf32>
      %c1_74 = arith.constant 1 : index
      %c10_75 = arith.constant 10 : index
      %c3_76 = arith.constant 3 : index
      %96 = vector.load %arg6[%c1_74, %c10_75, %c3_76] : memref<2x24x128xf32, #tpu.memory_space<vmem>>, vector<1x1x16xf32>
      %97 = vector.shape_cast %96 : vector<1x1x16xf32> to vector<16xf32>
      %98 = vector.shape_cast %95 : vector<16xf32> to vector<1x1x16xf32>
      tpu.vector_store %arg6[%c1_74, %c10_75, %c3_76], %98 {strides = array<i32>} : memref<2x24x128xf32, #tpu.memory_space<vmem>>, vector<1x1x16xf32>,
      %c0_77 = arith.constant 0 : index
      %c128 = arith.constant 128 : index
      %99 = vector.load %arg5[%c0_77, %c128] : memref<2x256xf32, #tpu.memory_space<vmem>>, vector<1x16xf32>
      %100 = vector.shape_cast %99 : vector<1x16xf32> to vector<16xf32>
      %c0_78 = arith.constant 0 : index
      %c11 = arith.constant 11 : index
      %c3_79 = arith.constant 3 : index
      %101 = vector.load %arg6[%c0_78, %c11, %c3_79] : memref<2x24x128xf32, #tpu.memory_space<vmem>>, vector<1x1x16xf32>
      %102 = vector.shape_cast %101 : vector<1x1x16xf32> to vector<16xf32>
      %103 = vector.shape_cast %100 : vector<16xf32> to vector<1x1x16xf32>
      tpu.vector_store %arg6[%c0_78, %c11, %c3_79], %103 {strides = array<i32>} : memref<2x24x128xf32, #tpu.memory_space<vmem>>, vector<1x1x16xf32>,
      %c1_80 = arith.constant 1 : index
      %c128_81 = arith.constant 128 : index
      %104 = vector.load %arg5[%c1_80, %c128_81] : memref<2x256xf32, #tpu.memory_space<vmem>>, vector<1x16xf32>
      %105 = vector.shape_cast %104 : vector<1x16xf32> to vector<16xf32>
      %c1_82 = arith.constant 1 : index
      %c11_83 = arith.constant 11 : index
      %c3_84 = arith.constant 3 : index
      %106 = vector.load %arg6[%c1_82, %c11_83, %c3_84] : memref<2x24x128xf32, #tpu.memory_space<vmem>>, vector<1x1x16xf32>
      %107 = vector.shape_cast %106 : vector<1x1x16xf32> to vector<16xf32>
      %108 = vector.shape_cast %105 : vector<16xf32> to vector<1x1x16xf32>
      tpu.vector_store %arg6[%c1_82, %c11_83, %c3_84], %108 {strides = array<i32>} : memref<2x24x128xf32, #tpu.memory_space<vmem>>, vector<1x1x16xf32>,
      %c0_85 = arith.constant 0 : index
      %c144 = arith.constant 144 : index
      %109 = vector.load %arg5[%c0_85, %c144] : memref<2x256xf32, #tpu.memory_space<vmem>>, vector<1x16xf32>
      %110 = vector.shape_cast %109 : vector<1x16xf32> to vector<16xf32>
      %c0_86 = arith.constant 0 : index
      %c12 = arith.constant 12 : index
      %c3_87 = arith.constant 3 : index
      %111 = vector.load %arg6[%c0_86, %c12, %c3_87] : memref<2x24x128xf32, #tpu.memory_space<vmem>>, vector<1x1x16xf32>
      %112 = vector.shape_cast %111 : vector<1x1x16xf32> to vector<16xf32>
      %113 = vector.shape_cast %110 : vector<16xf32> to vector<1x1x16xf32>
      tpu.vector_store %arg6[%c0_86, %c12, %c3_87], %113 {strides = array<i32>} : memref<2x24x128xf32, #tpu.memory_space<vmem>>, vector<1x1x16xf32>,
      %c1_88 = arith.constant 1 : index
      %c144_89 = arith.constant 144 : index
      %114 = vector.load %arg5[%c1_88, %c144_89] : memref<2x256xf32, #tpu.memory_space<vmem>>, vector<1x16xf32>
      %115 = vector.shape_cast %114 : vector<1x16xf32> to vector<16xf32>
      %c1_90 = arith.constant 1 : index
      %c12_91 = arith.constant 12 : index
      %c3_92 = arith.constant 3 : index
      %116 = vector.load %arg6[%c1_90, %c12_91, %c3_92] : memref<2x24x128xf32, #tpu.memory_space<vmem>>, vector<1x1x16xf32>
      %117 = vector.shape_cast %116 : vector<1x1x16xf32> to vector<16xf32>
      %118 = vector.shape_cast %115 : vector<16xf32> to vector<1x1x16xf32>
      tpu.vector_store %arg6[%c1_90, %c12_91, %c3_92], %118 {strides = array<i32>} : memref<2x24x128xf32, #tpu.memory_space<vmem>>, vector<1x1x16xf32>,
      %c0_93 = arith.constant 0 : index
      %c160 = arith.constant 160 : index
      %119 = vector.load %arg5[%c0_93, %c160] : memref<2x256xf32, #tpu.memory_space<vmem>>, vector<1x16xf32>
      %120 = vector.shape_cast %119 : vector<1x16xf32> to vector<16xf32>
      %c0_94 = arith.constant 0 : index
      %c13 = arith.constant 13 : index
      %c3_95 = arith.constant 3 : index
      %121 = vector.load %arg6[%c0_94, %c13, %c3_95] : memref<2x24x128xf32, #tpu.memory_space<vmem>>, vector<1x1x16xf32>
      %122 = vector.shape_cast %121 : vector<1x1x16xf32> to vector<16xf32>
      %123 = vector.shape_cast %120 : vector<16xf32> to vector<1x1x16xf32>
      tpu.vector_store %arg6[%c0_94, %c13, %c3_95], %123 {strides = array<i32>} : memref<2x24x128xf32, #tpu.memory_space<vmem>>, vector<1x1x16xf32>,
      %c1_96 = arith.constant 1 : index
      %c160_97 = arith.constant 160 : index
      %124 = vector.load %arg5[%c1_96, %c160_97] : memref<2x256xf32, #tpu.memory_space<vmem>>, vector<1x16xf32>
      %125 = vector.shape_cast %124 : vector<1x16xf32> to vector<16xf32>
      %c1_98 = arith.constant 1 : index
      %c13_99 = arith.constant 13 : index
      %c3_100 = arith.constant 3 : index
      %126 = vector.load %arg6[%c1_98, %c13_99, %c3_100] : memref<2x24x128xf32, #tpu.memory_space<vmem>>, vector<1x1x16xf32>
      %127 = vector.shape_cast %126 : vector<1x1x16xf32> to vector<16xf32>
      %128 = vector.shape_cast %125 : vector<16xf32> to vector<1x1x16xf32>
      tpu.vector_store %arg6[%c1_98, %c13_99, %c3_100], %128 {strides = array<i32>} : memref<2x24x128xf32, #tpu.memory_space<vmem>>, vector<1x1x16xf32>,
      %c0_101 = arith.constant 0 : index
      %c176 = arith.constant 176 : index
      %129 = vector.load %arg5[%c0_101, %c176] : memref<2x256xf32, #tpu.memory_space<vmem>>, vector<1x16xf32>
      %130 = vector.shape_cast %129 : vector<1x16xf32> to vector<16xf32>
      %c0_102 = arith.constant 0 : index
      %c14 = arith.constant 14 : index
      %c3_103 = arith.constant 3 : index
      %131 = vector.load %arg6[%c0_102, %c14, %c3_103] : memref<2x24x128xf32, #tpu.memory_space<vmem>>, vector<1x1x16xf32>
      %132 = vector.shape_cast %131 : vector<1x1x16xf32> to vector<16xf32>
      %133 = vector.shape_cast %130 : vector<16xf32> to vector<1x1x16xf32>
      tpu.vector_store %arg6[%c0_102, %c14, %c3_103], %133 {strides = array<i32>} : memref<2x24x128xf32, #tpu.memory_space<vmem>>, vector<1x1x16xf32>,
      %c1_104 = arith.constant 1 : index
      %c176_105 = arith.constant 176 : index
      %134 = vector.load %arg5[%c1_104, %c176_105] : memref<2x256xf32, #tpu.memory_space<vmem>>, vector<1x16xf32>
      %135 = vector.shape_cast %134 : vector<1x16xf32> to vector<16xf32>
      %c1_106 = arith.constant 1 : index
      %c14_107 = arith.constant 14 : index
      %c3_108 = arith.constant 3 : index
      %136 = vector.load %arg6[%c1_106, %c14_107, %c3_108] : memref<2x24x128xf32, #tpu.memory_space<vmem>>, vector<1x1x16xf32>
      %137 = vector.shape_cast %136 : vector<1x1x16xf32> to vector<16xf32>
      %138 = vector.shape_cast %135 : vector<16xf32> to vector<1x1x16xf32>
      tpu.vector_store %arg6[%c1_106, %c14_107, %c3_108], %138 {strides = array<i32>} : memref<2x24x128xf32, #tpu.memory_space<vmem>>, vector<1x1x16xf32>,
      %c0_109 = arith.constant 0 : index
      %c192 = arith.constant 192 : index
      %139 = vector.load %arg5[%c0_109, %c192] : memref<2x256xf32, #tpu.memory_space<vmem>>, vector<1x16xf32>
      %140 = vector.shape_cast %139 : vector<1x16xf32> to vector<16xf32>
      %c0_110 = arith.constant 0 : index
      %c15 = arith.constant 15 : index
      %c3_111 = arith.constant 3 : index
      %141 = vector.load %arg6[%c0_110, %c15, %c3_111] : memref<2x24x128xf32, #tpu.memory_space<vmem>>, vector<1x1x16xf32>
      %142 = vector.shape_cast %141 : vector<1x1x16xf32> to vector<16xf32>
      %143 = vector.shape_cast %140 : vector<16xf32> to vector<1x1x16xf32>
      tpu.vector_store %arg6[%c0_110, %c15, %c3_111], %143 {strides = array<i32>} : memref<2x24x128xf32, #tpu.memory_space<vmem>>, vector<1x1x16xf32>,
      %c1_112 = arith.constant 1 : index
      %c192_113 = arith.constant 192 : index
      %144 = vector.load %arg5[%c1_112, %c192_113] : memref<2x256xf32, #tpu.memory_space<vmem>>, vector<1x16xf32>
      %145 = vector.shape_cast %144 : vector<1x16xf32> to vector<16xf32>
      %c1_114 = arith.constant 1 : index
      %c15_115 = arith.constant 15 : index
      %c3_116 = arith.constant 3 : index
      %146 = vector.load %arg6[%c1_114, %c15_115, %c3_116] : memref<2x24x128xf32, #tpu.memory_space<vmem>>, vector<1x1x16xf32>
      %147 = vector.shape_cast %146 : vector<1x1x16xf32> to vector<16xf32>
      %148 = vector.shape_cast %145 : vector<16xf32> to vector<1x1x16xf32>
      tpu.vector_store %arg6[%c1_114, %c15_115, %c3_116], %148 {strides = array<i32>} : memref<2x24x128xf32, #tpu.memory_space<vmem>>, vector<1x1x16xf32>,
      %c0_117 = arith.constant 0 : index
      %c208 = arith.constant 208 : index
      %149 = vector.load %arg5[%c0_117, %c208] : memref<2x256xf32, #tpu.memory_space<vmem>>, vector<1x16xf32>
      %150 = vector.shape_cast %149 : vector<1x16xf32> to vector<16xf32>
      %c0_118 = arith.constant 0 : index
      %c16_119 = arith.constant 16 : index
      %c3_120 = arith.constant 3 : index
      %151 = vector.load %arg6[%c0_118, %c16_119, %c3_120] : memref<2x24x128xf32, #tpu.memory_space<vmem>>, vector<1x1x16xf32>
      %152 = vector.shape_cast %151 : vector<1x1x16xf32> to vector<16xf32>
      %153 = vector.shape_cast %150 : vector<16xf32> to vector<1x1x16xf32>
      tpu.vector_store %arg6[%c0_118, %c16_119, %c3_120], %153 {strides = array<i32>} : memref<2x24x128xf32, #tpu.memory_space<vmem>>, vector<1x1x16xf32>,
      %c1_121 = arith.constant 1 : index
      %c208_122 = arith.constant 208 : index
      %154 = vector.load %arg5[%c1_121, %c208_122] : memref<2x256xf32, #tpu.memory_space<vmem>>, vector<1x16xf32>
      %155 = vector.shape_cast %154 : vector<1x16xf32> to vector<16xf32>
      %c1_123 = arith.constant 1 : index
      %c16_124 = arith.constant 16 : index
      %c3_125 = arith.constant 3 : index
      %156 = vector.load %arg6[%c1_123, %c16_124, %c3_125] : memref<2x24x128xf32, #tpu.memory_space<vmem>>, vector<1x1x16xf32>
      %157 = vector.shape_cast %156 : vector<1x1x16xf32> to vector<16xf32>
      %158 = vector.shape_cast %155 : vector<16xf32> to vector<1x1x16xf32>
      tpu.vector_store %arg6[%c1_123, %c16_124, %c3_125], %158 {strides = array<i32>} : memref<2x24x128xf32, #tpu.memory_space<vmem>>, vector<1x1x16xf32>,
      %c0_126 = arith.constant 0 : index
      %c224 = arith.constant 224 : index
      %159 = vector.load %arg5[%c0_126, %c224] : memref<2x256xf32, #tpu.memory_space<vmem>>, vector<1x16xf32>
      %160 = vector.shape_cast %159 : vector<1x16xf32> to vector<16xf32>
      %c0_127 = arith.constant 0 : index
      %c17 = arith.constant 17 : index
      %c3_128 = arith.constant 3 : index
      %161 = vector.load %arg6[%c0_127, %c17, %c3_128] : memref<2x24x128xf32, #tpu.memory_space<vmem>>, vector<1x1x16xf32>
      %162 = vector.shape_cast %161 : vector<1x1x16xf32> to vector<16xf32>
      %163 = vector.shape_cast %160 : vector<16xf32> to vector<1x1x16xf32>
      tpu.vector_store %arg6[%c0_127, %c17, %c3_128], %163 {strides = array<i32>} : memref<2x24x128xf32, #tpu.memory_space<vmem>>, vector<1x1x16xf32>,
      %c1_129 = arith.constant 1 : index
      %c224_130 = arith.constant 224 : index
      %164 = vector.load %arg5[%c1_129, %c224_130] : memref<2x256xf32, #tpu.memory_space<vmem>>, vector<1x16xf32>
      %165 = vector.shape_cast %164 : vector<1x16xf32> to vector<16xf32>
      %c1_131 = arith.constant 1 : index
      %c17_132 = arith.constant 17 : index
      %c3_133 = arith.constant 3 : index
      %166 = vector.load %arg6[%c1_131, %c17_132, %c3_133] : memref<2x24x128xf32, #tpu.memory_space<vmem>>, vector<1x1x16xf32>
      %167 = vector.shape_cast %166 : vector<1x1x16xf32> to vector<16xf32>
      %168 = vector.shape_cast %165 : vector<16xf32> to vector<1x1x16xf32>
      tpu.vector_store %arg6[%c1_131, %c17_132, %c3_133], %168 {strides = array<i32>} : memref<2x24x128xf32, #tpu.memory_space<vmem>>, vector<1x1x16xf32>,
      %c0_134 = arith.constant 0 : index
      %c240 = arith.constant 240 : index
      %169 = vector.load %arg5[%c0_134, %c240] : memref<2x256xf32, #tpu.memory_space<vmem>>, vector<1x16xf32>
      %170 = vector.shape_cast %169 : vector<1x16xf32> to vector<16xf32>
      %c0_135 = arith.constant 0 : index
      %c18 = arith.constant 18 : index
      %c3_136 = arith.constant 3 : index
      %171 = vector.load %arg6[%c0_135, %c18, %c3_136] : memref<2x24x128xf32, #tpu.memory_space<vmem>>, vector<1x1x16xf32>
      %172 = vector.shape_cast %171 : vector<1x1x16xf32> to vector<16xf32>
      %173 = vector.shape_cast %170 : vector<16xf32> to vector<1x1x16xf32>
      tpu.vector_store %arg6[%c0_135, %c18, %c3_136], %173 {strides = array<i32>} : memref<2x24x128xf32, #tpu.memory_space<vmem>>, vector<1x1x16xf32>,
      %c1_137 = arith.constant 1 : index
      %c240_138 = arith.constant 240 : index
      %174 = vector.load %arg5[%c1_137, %c240_138] : memref<2x256xf32, #tpu.memory_space<vmem>>, vector<1x16xf32>
      %175 = vector.shape_cast %174 : vector<1x16xf32> to vector<16xf32>
      %c1_139 = arith.constant 1 : index
      %c18_140 = arith.constant 18 : index
      %c3_141 = arith.constant 3 : index
      %176 = vector.load %arg6[%c1_139, %c18_140, %c3_141] : memref<2x24x128xf32, #tpu.memory_space<vmem>>, vector<1x1x16xf32>
      %177 = vector.shape_cast %176 : vector<1x1x16xf32> to vector<16xf32>
      %178 = vector.shape_cast %175 : vector<16xf32> to vector<1x1x16xf32>
      tpu.vector_store %arg6[%c1_139, %c18_140, %c3_141], %178 {strides = array<i32>} : memref<2x24x128xf32, #tpu.memory_space<vmem>>, vector<1x1x16xf32>,
      %c0_142 = arith.constant 0 : index
      %c0_143 = arith.constant 0 : index
      %c0_144 = arith.constant 0 : index
      %179 = vector.load %arg6[%c0_142, %c0_143, %c0_144] : memref<2x24x128xf32, #tpu.memory_space<vmem>>, vector<1x16x128xf32>
      %180 = vector.shape_cast %179 : vector<1x16x128xf32> to vector<16x128xf32>
      %c0_145 = arith.constant 0 : index
      %181 = memref.load %arg2[%c0_145] : memref<98xf32, #tpu.memory_space<smem>>
      %182 = vector.broadcast %181 : f32 to vector<16x128xf32>
      %183 = arith.mulf %180, %182 : vector<16x128xf32>
      %c1_146 = arith.constant 1 : index
      %184 = memref.load %arg2[%c1_146] : memref<98xf32, #tpu.memory_space<smem>>
      %185 = vector.broadcast %184 : f32 to vector<16x128xf32>
      %186 = arith.mulf %180, %185 : vector<16x128xf32>
      %c2 = arith.constant 2 : index
      %187 = memref.load %arg2[%c2] : memref<98xf32, #tpu.memory_space<smem>>
      %188 = vector.broadcast %187 : f32 to vector<16x128xf32>
      %189 = arith.mulf %180, %188 : vector<16x128xf32>
      %c3_147 = arith.constant 3 : index
      %190 = memref.load %arg2[%c3_147] : memref<98xf32, #tpu.memory_space<smem>>
      %191 = vector.broadcast %190 : f32 to vector<16x128xf32>
      %192 = arith.mulf %180, %191 : vector<16x128xf32>
      %c4_148 = arith.constant 4 : index
      %193 = memref.load %arg2[%c4_148] : memref<98xf32, #tpu.memory_space<smem>>
      %194 = vector.broadcast %193 : f32 to vector<16x128xf32>
      %195 = arith.mulf %180, %194 : vector<16x128xf32>
      %c5_149 = arith.constant 5 : index
      %196 = memref.load %arg2[%c5_149] : memref<98xf32, #tpu.memory_space<smem>>
      %197 = vector.broadcast %196 : f32 to vector<16x128xf32>
      %198 = arith.mulf %180, %197 : vector<16x128xf32>
      %c6_150 = arith.constant 6 : index
      %199 = memref.load %arg2[%c6_150] : memref<98xf32, #tpu.memory_space<smem>>
      %200 = vector.broadcast %199 : f32 to vector<16x128xf32>
      %201 = arith.mulf %180, %200 : vector<16x128xf32>
      %c0_151 = arith.constant 0 : index
      %c1_152 = arith.constant 1 : index
      %c0_153 = arith.constant 0 : index
      %202 = vector.load %arg6[%c0_151, %c1_152, %c0_153] : memref<2x24x128xf32, #tpu.memory_space<vmem>>, vector<1x16x128xf32>
      %203 = vector.shape_cast %202 : vector<1x16x128xf32> to vector<16x128xf32>
      %c7_154 = arith.constant 7 : index
      %204 = memref.load %arg2[%c7_154] : memref<98xf32, #tpu.memory_space<smem>>
      %205 = vector.broadcast %204 : f32 to vector<16x128xf32>
      %206 = arith.mulf %203, %205 : vector<16x128xf32>
      %207 = arith.addf %183, %206 : vector<16x128xf32>
      %c8_155 = arith.constant 8 : index
      %208 = memref.load %arg2[%c8_155] : memref<98xf32, #tpu.memory_space<smem>>
      %209 = vector.broadcast %208 : f32 to vector<16x128xf32>
      %210 = arith.mulf %203, %209 : vector<16x128xf32>
      %211 = arith.addf %186, %210 : vector<16x128xf32>
      %c9_156 = arith.constant 9 : index
      %212 = memref.load %arg2[%c9_156] : memref<98xf32, #tpu.memory_space<smem>>
      %213 = vector.broadcast %212 : f32 to vector<16x128xf32>
      %214 = arith.mulf %203, %213 : vector<16x128xf32>
      %215 = arith.addf %189, %214 : vector<16x128xf32>
      %c10_157 = arith.constant 10 : index
      %216 = memref.load %arg2[%c10_157] : memref<98xf32, #tpu.memory_space<smem>>
      %217 = vector.broadcast %216 : f32 to vector<16x128xf32>
      %218 = arith.mulf %203, %217 : vector<16x128xf32>
      %219 = arith.addf %192, %218 : vector<16x128xf32>
      %c11_158 = arith.constant 11 : index
      %220 = memref.load %arg2[%c11_158] : memref<98xf32, #tpu.memory_space<smem>>
      %221 = vector.broadcast %220 : f32 to vector<16x128xf32>
      %222 = arith.mulf %203, %221 : vector<16x128xf32>
      %223 = arith.addf %195, %222 : vector<16x128xf32>
      %c12_159 = arith.constant 12 : index
      %224 = memref.load %arg2[%c12_159] : memref<98xf32, #tpu.memory_space<smem>>
      %225 = vector.broadcast %224 : f32 to vector<16x128xf32>
      %226 = arith.mulf %203, %225 : vector<16x128xf32>
      %227 = arith.addf %198, %226 : vector<16x128xf32>
      %c13_160 = arith.constant 13 : index
      %228 = memref.load %arg2[%c13_160] : memref<98xf32, #tpu.memory_space<smem>>
      %229 = vector.broadcast %228 : f32 to vector<16x128xf32>
      %230 = arith.mulf %203, %229 : vector<16x128xf32>
      %231 = arith.addf %201, %230 : vector<16x128xf32>
      %c0_161 = arith.constant 0 : index
      %c2_162 = arith.constant 2 : index
      %c0_163 = arith.constant 0 : index
      %232 = vector.load %arg6[%c0_161, %c2_162, %c0_163] : memref<2x24x128xf32, #tpu.memory_space<vmem>>, vector<1x16x128xf32>
      %233 = vector.shape_cast %232 : vector<1x16x128xf32> to vector<16x128xf32>
      %c14_164 = arith.constant 14 : index
      %234 = memref.load %arg2[%c14_164] : memref<98xf32, #tpu.memory_space<smem>>
      %235 = vector.broadcast %234 : f32 to vector<16x128xf32>
      %236 = arith.mulf %233, %235 : vector<16x128xf32>
      %237 = arith.addf %207, %236 : vector<16x128xf32>
      %c15_165 = arith.constant 15 : index
      %238 = memref.load %arg2[%c15_165] : memref<98xf32, #tpu.memory_space<smem>>
      %239 = vector.broadcast %238 : f32 to vector<16x128xf32>
      %240 = arith.mulf %233, %239 : vector<16x128xf32>
      %241 = arith.addf %211, %240 : vector<16x128xf32>
      %c16_166 = arith.constant 16 : index
      %242 = memref.load %arg2[%c16_166] : memref<98xf32, #tpu.memory_space<smem>>
      %243 = vector.broadcast %242 : f32 to vector<16x128xf32>
      %244 = arith.mulf %233, %243 : vector<16x128xf32>
      %245 = arith.addf %215, %244 : vector<16x128xf32>
      %c17_167 = arith.constant 17 : index
      %246 = memref.load %arg2[%c17_167] : memref<98xf32, #tpu.memory_space<smem>>
      %247 = vector.broadcast %246 : f32 to vector<16x128xf32>
      %248 = arith.mulf %233, %247 : vector<16x128xf32>
      %249 = arith.addf %219, %248 : vector<16x128xf32>
      %c18_168 = arith.constant 18 : index
      %250 = memref.load %arg2[%c18_168] : memref<98xf32, #tpu.memory_space<smem>>
      %251 = vector.broadcast %250 : f32 to vector<16x128xf32>
      %252 = arith.mulf %233, %251 : vector<16x128xf32>
      %253 = arith.addf %223, %252 : vector<16x128xf32>
      %c19 = arith.constant 19 : index
      %254 = memref.load %arg2[%c19] : memref<98xf32, #tpu.memory_space<smem>>
      %255 = vector.broadcast %254 : f32 to vector<16x128xf32>
      %256 = arith.mulf %233, %255 : vector<16x128xf32>
      %257 = arith.addf %227, %256 : vector<16x128xf32>
      %c20 = arith.constant 20 : index
      %258 = memref.load %arg2[%c20] : memref<98xf32, #tpu.memory_space<smem>>
      %259 = vector.broadcast %258 : f32 to vector<16x128xf32>
      %260 = arith.mulf %233, %259 : vector<16x128xf32>
      %261 = arith.addf %231, %260 : vector<16x128xf32>
      %c0_169 = arith.constant 0 : index
      %c3_170 = arith.constant 3 : index
      %c0_171 = arith.constant 0 : index
      %262 = vector.load %arg6[%c0_169, %c3_170, %c0_171] : memref<2x24x128xf32, #tpu.memory_space<vmem>>, vector<1x16x128xf32>
      %263 = vector.shape_cast %262 : vector<1x16x128xf32> to vector<16x128xf32>
      %c21 = arith.constant 21 : index
      %264 = memref.load %arg2[%c21] : memref<98xf32, #tpu.memory_space<smem>>
      %265 = vector.broadcast %264 : f32 to vector<16x128xf32>
      %266 = arith.mulf %263, %265 : vector<16x128xf32>
      %267 = arith.addf %237, %266 : vector<16x128xf32>
      %c22 = arith.constant 22 : index
      %268 = memref.load %arg2[%c22] : memref<98xf32, #tpu.memory_space<smem>>
      %269 = vector.broadcast %268 : f32 to vector<16x128xf32>
      %270 = arith.mulf %263, %269 : vector<16x128xf32>
      %271 = arith.addf %241, %270 : vector<16x128xf32>
      %c23 = arith.constant 23 : index
      %272 = memref.load %arg2[%c23] : memref<98xf32, #tpu.memory_space<smem>>
      %273 = vector.broadcast %272 : f32 to vector<16x128xf32>
      %274 = arith.mulf %263, %273 : vector<16x128xf32>
      %275 = arith.addf %245, %274 : vector<16x128xf32>
      %c24 = arith.constant 24 : index
      %276 = memref.load %arg2[%c24] : memref<98xf32, #tpu.memory_space<smem>>
      %277 = vector.broadcast %276 : f32 to vector<16x128xf32>
      %278 = arith.mulf %263, %277 : vector<16x128xf32>
      %279 = arith.addf %249, %278 : vector<16x128xf32>
      %c25 = arith.constant 25 : index
      %280 = memref.load %arg2[%c25] : memref<98xf32, #tpu.memory_space<smem>>
      %281 = vector.broadcast %280 : f32 to vector<16x128xf32>
      %282 = arith.mulf %263, %281 : vector<16x128xf32>
      %283 = arith.addf %253, %282 : vector<16x128xf32>
      %c26 = arith.constant 26 : index
      %284 = memref.load %arg2[%c26] : memref<98xf32, #tpu.memory_space<smem>>
      %285 = vector.broadcast %284 : f32 to vector<16x128xf32>
      %286 = arith.mulf %263, %285 : vector<16x128xf32>
      %287 = arith.addf %257, %286 : vector<16x128xf32>
      %c27 = arith.constant 27 : index
      %288 = memref.load %arg2[%c27] : memref<98xf32, #tpu.memory_space<smem>>
      %289 = vector.broadcast %288 : f32 to vector<16x128xf32>
      %290 = arith.mulf %263, %289 : vector<16x128xf32>
      %291 = arith.addf %261, %290 : vector<16x128xf32>
      %c0_172 = arith.constant 0 : index
      %c4_173 = arith.constant 4 : index
      %c0_174 = arith.constant 0 : index
      %292 = vector.load %arg6[%c0_172, %c4_173, %c0_174] : memref<2x24x128xf32, #tpu.memory_space<vmem>>, vector<1x16x128xf32>
      %293 = vector.shape_cast %292 : vector<1x16x128xf32> to vector<16x128xf32>
      %c28 = arith.constant 28 : index
      %294 = memref.load %arg2[%c28] : memref<98xf32, #tpu.memory_space<smem>>
      %295 = vector.broadcast %294 : f32 to vector<16x128xf32>
      %296 = arith.mulf %293, %295 : vector<16x128xf32>
      %297 = arith.addf %267, %296 : vector<16x128xf32>
      %c29 = arith.constant 29 : index
      %298 = memref.load %arg2[%c29] : memref<98xf32, #tpu.memory_space<smem>>
      %299 = vector.broadcast %298 : f32 to vector<16x128xf32>
      %300 = arith.mulf %293, %299 : vector<16x128xf32>
      %301 = arith.addf %271, %300 : vector<16x128xf32>
      %c30 = arith.constant 30 : index
      %302 = memref.load %arg2[%c30] : memref<98xf32, #tpu.memory_space<smem>>
      %303 = vector.broadcast %302 : f32 to vector<16x128xf32>
      %304 = arith.mulf %293, %303 : vector<16x128xf32>
      %305 = arith.addf %275, %304 : vector<16x128xf32>
      %c31 = arith.constant 31 : index
      %306 = memref.load %arg2[%c31] : memref<98xf32, #tpu.memory_space<smem>>
      %307 = vector.broadcast %306 : f32 to vector<16x128xf32>
      %308 = arith.mulf %293, %307 : vector<16x128xf32>
      %309 = arith.addf %279, %308 : vector<16x128xf32>
      %c32_175 = arith.constant 32 : index
      %310 = memref.load %arg2[%c32_175] : memref<98xf32, #tpu.memory_space<smem>>
      %311 = vector.broadcast %310 : f32 to vector<16x128xf32>
      %312 = arith.mulf %293, %311 : vector<16x128xf32>
      %313 = arith.addf %283, %312 : vector<16x128xf32>
      %c33 = arith.constant 33 : index
      %314 = memref.load %arg2[%c33] : memref<98xf32, #tpu.memory_space<smem>>
      %315 = vector.broadcast %314 : f32 to vector<16x128xf32>
      %316 = arith.mulf %293, %315 : vector<16x128xf32>
      %317 = arith.addf %287, %316 : vector<16x128xf32>
      %c34 = arith.constant 34 : index
      %318 = memref.load %arg2[%c34] : memref<98xf32, #tpu.memory_space<smem>>
      %319 = vector.broadcast %318 : f32 to vector<16x128xf32>
      %320 = arith.mulf %293, %319 : vector<16x128xf32>
      %321 = arith.addf %291, %320 : vector<16x128xf32>
      %c0_176 = arith.constant 0 : index
      %c5_177 = arith.constant 5 : index
      %c0_178 = arith.constant 0 : index
      %322 = vector.load %arg6[%c0_176, %c5_177, %c0_178] : memref<2x24x128xf32, #tpu.memory_space<vmem>>, vector<1x16x128xf32>
      %323 = vector.shape_cast %322 : vector<1x16x128xf32> to vector<16x128xf32>
      %c35 = arith.constant 35 : index
      %324 = memref.load %arg2[%c35] : memref<98xf32, #tpu.memory_space<smem>>
      %325 = vector.broadcast %324 : f32 to vector<16x128xf32>
      %326 = arith.mulf %323, %325 : vector<16x128xf32>
      %327 = arith.addf %297, %326 : vector<16x128xf32>
      %c36 = arith.constant 36 : index
      %328 = memref.load %arg2[%c36] : memref<98xf32, #tpu.memory_space<smem>>
      %329 = vector.broadcast %328 : f32 to vector<16x128xf32>
      %330 = arith.mulf %323, %329 : vector<16x128xf32>
      %331 = arith.addf %301, %330 : vector<16x128xf32>
      %c37 = arith.constant 37 : index
      %332 = memref.load %arg2[%c37] : memref<98xf32, #tpu.memory_space<smem>>
      %333 = vector.broadcast %332 : f32 to vector<16x128xf32>
      %334 = arith.mulf %323, %333 : vector<16x128xf32>
      %335 = arith.addf %305, %334 : vector<16x128xf32>
      %c38 = arith.constant 38 : index
      %336 = memref.load %arg2[%c38] : memref<98xf32, #tpu.memory_space<smem>>
      %337 = vector.broadcast %336 : f32 to vector<16x128xf32>
      %338 = arith.mulf %323, %337 : vector<16x128xf32>
      %339 = arith.addf %309, %338 : vector<16x128xf32>
      %c39 = arith.constant 39 : index
      %340 = memref.load %arg2[%c39] : memref<98xf32, #tpu.memory_space<smem>>
      %341 = vector.broadcast %340 : f32 to vector<16x128xf32>
      %342 = arith.mulf %323, %341 : vector<16x128xf32>
      %343 = arith.addf %313, %342 : vector<16x128xf32>
      %c40 = arith.constant 40 : index
      %344 = memref.load %arg2[%c40] : memref<98xf32, #tpu.memory_space<smem>>
      %345 = vector.broadcast %344 : f32 to vector<16x128xf32>
      %346 = arith.mulf %323, %345 : vector<16x128xf32>
      %347 = arith.addf %317, %346 : vector<16x128xf32>
      %c41 = arith.constant 41 : index
      %348 = memref.load %arg2[%c41] : memref<98xf32, #tpu.memory_space<smem>>
      %349 = vector.broadcast %348 : f32 to vector<16x128xf32>
      %350 = arith.mulf %323, %349 : vector<16x128xf32>
      %351 = arith.addf %321, %350 : vector<16x128xf32>
      %c0_179 = arith.constant 0 : index
      %c6_180 = arith.constant 6 : index
      %c0_181 = arith.constant 0 : index
      %352 = vector.load %arg6[%c0_179, %c6_180, %c0_181] : memref<2x24x128xf32, #tpu.memory_space<vmem>>, vector<1x16x128xf32>
      %353 = vector.shape_cast %352 : vector<1x16x128xf32> to vector<16x128xf32>
      %c42 = arith.constant 42 : index
      %354 = memref.load %arg2[%c42] : memref<98xf32, #tpu.memory_space<smem>>
      %355 = vector.broadcast %354 : f32 to vector<16x128xf32>
      %356 = arith.mulf %353, %355 : vector<16x128xf32>
      %357 = arith.addf %327, %356 : vector<16x128xf32>
      %c43 = arith.constant 43 : index
      %358 = memref.load %arg2[%c43] : memref<98xf32, #tpu.memory_space<smem>>
      %359 = vector.broadcast %358 : f32 to vector<16x128xf32>
      %360 = arith.mulf %353, %359 : vector<16x128xf32>
      %361 = arith.addf %331, %360 : vector<16x128xf32>
      %c44 = arith.constant 44 : index
      %362 = memref.load %arg2[%c44] : memref<98xf32, #tpu.memory_space<smem>>
      %363 = vector.broadcast %362 : f32 to vector<16x128xf32>
      %364 = arith.mulf %353, %363 : vector<16x128xf32>
      %365 = arith.addf %335, %364 : vector<16x128xf32>
      %c45 = arith.constant 45 : index
      %366 = memref.load %arg2[%c45] : memref<98xf32, #tpu.memory_space<smem>>
      %367 = vector.broadcast %366 : f32 to vector<16x128xf32>
      %368 = arith.mulf %353, %367 : vector<16x128xf32>
      %369 = arith.addf %339, %368 : vector<16x128xf32>
      %c46 = arith.constant 46 : index
      %370 = memref.load %arg2[%c46] : memref<98xf32, #tpu.memory_space<smem>>
      %371 = vector.broadcast %370 : f32 to vector<16x128xf32>
      %372 = arith.mulf %353, %371 : vector<16x128xf32>
      %373 = arith.addf %343, %372 : vector<16x128xf32>
      %c47 = arith.constant 47 : index
      %374 = memref.load %arg2[%c47] : memref<98xf32, #tpu.memory_space<smem>>
      %375 = vector.broadcast %374 : f32 to vector<16x128xf32>
      %376 = arith.mulf %353, %375 : vector<16x128xf32>
      %377 = arith.addf %347, %376 : vector<16x128xf32>
      %c48_182 = arith.constant 48 : index
      %378 = memref.load %arg2[%c48_182] : memref<98xf32, #tpu.memory_space<smem>>
      %379 = vector.broadcast %378 : f32 to vector<16x128xf32>
      %380 = arith.mulf %353, %379 : vector<16x128xf32>
      %381 = arith.addf %351, %380 : vector<16x128xf32>
      %c1_183 = arith.constant 1 : index
      %c0_184 = arith.constant 0 : index
      %c0_185 = arith.constant 0 : index
      %382 = vector.load %arg6[%c1_183, %c0_184, %c0_185] : memref<2x24x128xf32, #tpu.memory_space<vmem>>, vector<1x16x128xf32>
      %383 = vector.shape_cast %382 : vector<1x16x128xf32> to vector<16x128xf32>
      %c49 = arith.constant 49 : index
      %384 = memref.load %arg2[%c49] : memref<98xf32, #tpu.memory_space<smem>>
      %385 = vector.broadcast %384 : f32 to vector<16x128xf32>
      %386 = arith.mulf %383, %385 : vector<16x128xf32>
      %387 = arith.addf %357, %386 : vector<16x128xf32>
      %c50 = arith.constant 50 : index
      %388 = memref.load %arg2[%c50] : memref<98xf32, #tpu.memory_space<smem>>
      %389 = vector.broadcast %388 : f32 to vector<16x128xf32>
      %390 = arith.mulf %383, %389 : vector<16x128xf32>
      %391 = arith.addf %361, %390 : vector<16x128xf32>
      %c51 = arith.constant 51 : index
      %392 = memref.load %arg2[%c51] : memref<98xf32, #tpu.memory_space<smem>>
      %393 = vector.broadcast %392 : f32 to vector<16x128xf32>
      %394 = arith.mulf %383, %393 : vector<16x128xf32>
      %395 = arith.addf %365, %394 : vector<16x128xf32>
      %c52 = arith.constant 52 : index
      %396 = memref.load %arg2[%c52] : memref<98xf32, #tpu.memory_space<smem>>
      %397 = vector.broadcast %396 : f32 to vector<16x128xf32>
      %398 = arith.mulf %383, %397 : vector<16x128xf32>
      %399 = arith.addf %369, %398 : vector<16x128xf32>
      %c53 = arith.constant 53 : index
      %400 = memref.load %arg2[%c53] : memref<98xf32, #tpu.memory_space<smem>>
      %401 = vector.broadcast %400 : f32 to vector<16x128xf32>
      %402 = arith.mulf %383, %401 : vector<16x128xf32>
      %403 = arith.addf %373, %402 : vector<16x128xf32>
      %c54 = arith.constant 54 : index
      %404 = memref.load %arg2[%c54] : memref<98xf32, #tpu.memory_space<smem>>
      %405 = vector.broadcast %404 : f32 to vector<16x128xf32>
      %406 = arith.mulf %383, %405 : vector<16x128xf32>
      %407 = arith.addf %377, %406 : vector<16x128xf32>
      %c55 = arith.constant 55 : index
      %408 = memref.load %arg2[%c55] : memref<98xf32, #tpu.memory_space<smem>>
      %409 = vector.broadcast %408 : f32 to vector<16x128xf32>
      %410 = arith.mulf %383, %409 : vector<16x128xf32>
      %411 = arith.addf %381, %410 : vector<16x128xf32>
      %c1_186 = arith.constant 1 : index
      %c1_187 = arith.constant 1 : index
      %c0_188 = arith.constant 0 : index
      %412 = vector.load %arg6[%c1_186, %c1_187, %c0_188] : memref<2x24x128xf32, #tpu.memory_space<vmem>>, vector<1x16x128xf32>
      %413 = vector.shape_cast %412 : vector<1x16x128xf32> to vector<16x128xf32>
      %c56 = arith.constant 56 : index
      %414 = memref.load %arg2[%c56] : memref<98xf32, #tpu.memory_space<smem>>
      %415 = vector.broadcast %414 : f32 to vector<16x128xf32>
      %416 = arith.mulf %413, %415 : vector<16x128xf32>
      %417 = arith.addf %387, %416 : vector<16x128xf32>
      %c57 = arith.constant 57 : index
      %418 = memref.load %arg2[%c57] : memref<98xf32, #tpu.memory_space<smem>>
      %419 = vector.broadcast %418 : f32 to vector<16x128xf32>
      %420 = arith.mulf %413, %419 : vector<16x128xf32>
      %421 = arith.addf %391, %420 : vector<16x128xf32>
      %c58 = arith.constant 58 : index
      %422 = memref.load %arg2[%c58] : memref<98xf32, #tpu.memory_space<smem>>
      %423 = vector.broadcast %422 : f32 to vector<16x128xf32>
      %424 = arith.mulf %413, %423 : vector<16x128xf32>
      %425 = arith.addf %395, %424 : vector<16x128xf32>
      %c59 = arith.constant 59 : index
      %426 = memref.load %arg2[%c59] : memref<98xf32, #tpu.memory_space<smem>>
      %427 = vector.broadcast %426 : f32 to vector<16x128xf32>
      %428 = arith.mulf %413, %427 : vector<16x128xf32>
      %429 = arith.addf %399, %428 : vector<16x128xf32>
      %c60 = arith.constant 60 : index
      %430 = memref.load %arg2[%c60] : memref<98xf32, #tpu.memory_space<smem>>
      %431 = vector.broadcast %430 : f32 to vector<16x128xf32>
      %432 = arith.mulf %413, %431 : vector<16x128xf32>
      %433 = arith.addf %403, %432 : vector<16x128xf32>
      %c61 = arith.constant 61 : index
      %434 = memref.load %arg2[%c61] : memref<98xf32, #tpu.memory_space<smem>>
      %435 = vector.broadcast %434 : f32 to vector<16x128xf32>
      %436 = arith.mulf %413, %435 : vector<16x128xf32>
      %437 = arith.addf %407, %436 : vector<16x128xf32>
      %c62 = arith.constant 62 : index
      %438 = memref.load %arg2[%c62] : memref<98xf32, #tpu.memory_space<smem>>
      %439 = vector.broadcast %438 : f32 to vector<16x128xf32>
      %440 = arith.mulf %413, %439 : vector<16x128xf32>
      %441 = arith.addf %411, %440 : vector<16x128xf32>
      %c1_189 = arith.constant 1 : index
      %c2_190 = arith.constant 2 : index
      %c0_191 = arith.constant 0 : index
      %442 = vector.load %arg6[%c1_189, %c2_190, %c0_191] : memref<2x24x128xf32, #tpu.memory_space<vmem>>, vector<1x16x128xf32>
      %443 = vector.shape_cast %442 : vector<1x16x128xf32> to vector<16x128xf32>
      %c63 = arith.constant 63 : index
      %444 = memref.load %arg2[%c63] : memref<98xf32, #tpu.memory_space<smem>>
      %445 = vector.broadcast %444 : f32 to vector<16x128xf32>
      %446 = arith.mulf %443, %445 : vector<16x128xf32>
      %447 = arith.addf %417, %446 : vector<16x128xf32>
      %c64_192 = arith.constant 64 : index
      %448 = memref.load %arg2[%c64_192] : memref<98xf32, #tpu.memory_space<smem>>
      %449 = vector.broadcast %448 : f32 to vector<16x128xf32>
      %450 = arith.mulf %443, %449 : vector<16x128xf32>
      %451 = arith.addf %421, %450 : vector<16x128xf32>
      %c65 = arith.constant 65 : index
      %452 = memref.load %arg2[%c65] : memref<98xf32, #tpu.memory_space<smem>>
      %453 = vector.broadcast %452 : f32 to vector<16x128xf32>
      %454 = arith.mulf %443, %453 : vector<16x128xf32>
      %455 = arith.addf %425, %454 : vector<16x128xf32>
      %c66 = arith.constant 66 : index
      %456 = memref.load %arg2[%c66] : memref<98xf32, #tpu.memory_space<smem>>
      %457 = vector.broadcast %456 : f32 to vector<16x128xf32>
      %458 = arith.mulf %443, %457 : vector<16x128xf32>
      %459 = arith.addf %429, %458 : vector<16x128xf32>
      %c67 = arith.constant 67 : index
      %460 = memref.load %arg2[%c67] : memref<98xf32, #tpu.memory_space<smem>>
      %461 = vector.broadcast %460 : f32 to vector<16x128xf32>
      %462 = arith.mulf %443, %461 : vector<16x128xf32>
      %463 = arith.addf %433, %462 : vector<16x128xf32>
      %c68 = arith.constant 68 : index
      %464 = memref.load %arg2[%c68] : memref<98xf32, #tpu.memory_space<smem>>
      %465 = vector.broadcast %464 : f32 to vector<16x128xf32>
      %466 = arith.mulf %443, %465 : vector<16x128xf32>
      %467 = arith.addf %437, %466 : vector<16x128xf32>
      %c69 = arith.constant 69 : index
      %468 = memref.load %arg2[%c69] : memref<98xf32, #tpu.memory_space<smem>>
      %469 = vector.broadcast %468 : f32 to vector<16x128xf32>
      %470 = arith.mulf %443, %469 : vector<16x128xf32>
      %471 = arith.addf %441, %470 : vector<16x128xf32>
      %c1_193 = arith.constant 1 : index
      %c3_194 = arith.constant 3 : index
      %c0_195 = arith.constant 0 : index
      %472 = vector.load %arg6[%c1_193, %c3_194, %c0_195] : memref<2x24x128xf32, #tpu.memory_space<vmem>>, vector<1x16x128xf32>
      %473 = vector.shape_cast %472 : vector<1x16x128xf32> to vector<16x128xf32>
      %c70 = arith.constant 70 : index
      %474 = memref.load %arg2[%c70] : memref<98xf32, #tpu.memory_space<smem>>
      %475 = vector.broadcast %474 : f32 to vector<16x128xf32>
      %476 = arith.mulf %473, %475 : vector<16x128xf32>
      %477 = arith.addf %447, %476 : vector<16x128xf32>
      %c71 = arith.constant 71 : index
      %478 = memref.load %arg2[%c71] : memref<98xf32, #tpu.memory_space<smem>>
      %479 = vector.broadcast %478 : f32 to vector<16x128xf32>
      %480 = arith.mulf %473, %479 : vector<16x128xf32>
      %481 = arith.addf %451, %480 : vector<16x128xf32>
      %c72 = arith.constant 72 : index
      %482 = memref.load %arg2[%c72] : memref<98xf32, #tpu.memory_space<smem>>
      %483 = vector.broadcast %482 : f32 to vector<16x128xf32>
      %484 = arith.mulf %473, %483 : vector<16x128xf32>
      %485 = arith.addf %455, %484 : vector<16x128xf32>
      %c73 = arith.constant 73 : index
      %486 = memref.load %arg2[%c73] : memref<98xf32, #tpu.memory_space<smem>>
      %487 = vector.broadcast %486 : f32 to vector<16x128xf32>
      %488 = arith.mulf %473, %487 : vector<16x128xf32>
      %489 = arith.addf %459, %488 : vector<16x128xf32>
      %c74 = arith.constant 74 : index
      %490 = memref.load %arg2[%c74] : memref<98xf32, #tpu.memory_space<smem>>
      %491 = vector.broadcast %490 : f32 to vector<16x128xf32>
      %492 = arith.mulf %473, %491 : vector<16x128xf32>
      %493 = arith.addf %463, %492 : vector<16x128xf32>
      %c75 = arith.constant 75 : index
      %494 = memref.load %arg2[%c75] : memref<98xf32, #tpu.memory_space<smem>>
      %495 = vector.broadcast %494 : f32 to vector<16x128xf32>
      %496 = arith.mulf %473, %495 : vector<16x128xf32>
      %497 = arith.addf %467, %496 : vector<16x128xf32>
      %c76 = arith.constant 76 : index
      %498 = memref.load %arg2[%c76] : memref<98xf32, #tpu.memory_space<smem>>
      %499 = vector.broadcast %498 : f32 to vector<16x128xf32>
      %500 = arith.mulf %473, %499 : vector<16x128xf32>
      %501 = arith.addf %471, %500 : vector<16x128xf32>
      %c1_196 = arith.constant 1 : index
      %c4_197 = arith.constant 4 : index
      %c0_198 = arith.constant 0 : index
      %502 = vector.load %arg6[%c1_196, %c4_197, %c0_198] : memref<2x24x128xf32, #tpu.memory_space<vmem>>, vector<1x16x128xf32>
      %503 = vector.shape_cast %502 : vector<1x16x128xf32> to vector<16x128xf32>
      %c77 = arith.constant 77 : index
      %504 = memref.load %arg2[%c77] : memref<98xf32, #tpu.memory_space<smem>>
      %505 = vector.broadcast %504 : f32 to vector<16x128xf32>
      %506 = arith.mulf %503, %505 : vector<16x128xf32>
      %507 = arith.addf %477, %506 : vector<16x128xf32>
      %c78 = arith.constant 78 : index
      %508 = memref.load %arg2[%c78] : memref<98xf32, #tpu.memory_space<smem>>
      %509 = vector.broadcast %508 : f32 to vector<16x128xf32>
      %510 = arith.mulf %503, %509 : vector<16x128xf32>
      %511 = arith.addf %481, %510 : vector<16x128xf32>
      %c79 = arith.constant 79 : index
      %512 = memref.load %arg2[%c79] : memref<98xf32, #tpu.memory_space<smem>>
      %513 = vector.broadcast %512 : f32 to vector<16x128xf32>
      %514 = arith.mulf %503, %513 : vector<16x128xf32>
      %515 = arith.addf %485, %514 : vector<16x128xf32>
      %c80_199 = arith.constant 80 : index
      %516 = memref.load %arg2[%c80_199] : memref<98xf32, #tpu.memory_space<smem>>
      %517 = vector.broadcast %516 : f32 to vector<16x128xf32>
      %518 = arith.mulf %503, %517 : vector<16x128xf32>
      %519 = arith.addf %489, %518 : vector<16x128xf32>
      %c81 = arith.constant 81 : index
      %520 = memref.load %arg2[%c81] : memref<98xf32, #tpu.memory_space<smem>>
      %521 = vector.broadcast %520 : f32 to vector<16x128xf32>
      %522 = arith.mulf %503, %521 : vector<16x128xf32>
      %523 = arith.addf %493, %522 : vector<16x128xf32>
      %c82 = arith.constant 82 : index
      %524 = memref.load %arg2[%c82] : memref<98xf32, #tpu.memory_space<smem>>
      %525 = vector.broadcast %524 : f32 to vector<16x128xf32>
      %526 = arith.mulf %503, %525 : vector<16x128xf32>
      %527 = arith.addf %497, %526 : vector<16x128xf32>
      %c83 = arith.constant 83 : index
      %528 = memref.load %arg2[%c83] : memref<98xf32, #tpu.memory_space<smem>>
      %529 = vector.broadcast %528 : f32 to vector<16x128xf32>
      %530 = arith.mulf %503, %529 : vector<16x128xf32>
      %531 = arith.addf %501, %530 : vector<16x128xf32>
      %c1_200 = arith.constant 1 : index
      %c5_201 = arith.constant 5 : index
      %c0_202 = arith.constant 0 : index
      %532 = vector.load %arg6[%c1_200, %c5_201, %c0_202] : memref<2x24x128xf32, #tpu.memory_space<vmem>>, vector<1x16x128xf32>
      %533 = vector.shape_cast %532 : vector<1x16x128xf32> to vector<16x128xf32>
      %c84 = arith.constant 84 : index
      %534 = memref.load %arg2[%c84] : memref<98xf32, #tpu.memory_space<smem>>
      %535 = vector.broadcast %534 : f32 to vector<16x128xf32>
      %536 = arith.mulf %533, %535 : vector<16x128xf32>
      %537 = arith.addf %507, %536 : vector<16x128xf32>
      %c85 = arith.constant 85 : index
      %538 = memref.load %arg2[%c85] : memref<98xf32, #tpu.memory_space<smem>>
      %539 = vector.broadcast %538 : f32 to vector<16x128xf32>
      %540 = arith.mulf %533, %539 : vector<16x128xf32>
      %541 = arith.addf %511, %540 : vector<16x128xf32>
      %c86 = arith.constant 86 : index
      %542 = memref.load %arg2[%c86] : memref<98xf32, #tpu.memory_space<smem>>
      %543 = vector.broadcast %542 : f32 to vector<16x128xf32>
      %544 = arith.mulf %533, %543 : vector<16x128xf32>
      %545 = arith.addf %515, %544 : vector<16x128xf32>
      %c87 = arith.constant 87 : index
      %546 = memref.load %arg2[%c87] : memref<98xf32, #tpu.memory_space<smem>>
      %547 = vector.broadcast %546 : f32 to vector<16x128xf32>
      %548 = arith.mulf %533, %547 : vector<16x128xf32>
      %549 = arith.addf %519, %548 : vector<16x128xf32>
      %c88 = arith.constant 88 : index
      %550 = memref.load %arg2[%c88] : memref<98xf32, #tpu.memory_space<smem>>
      %551 = vector.broadcast %550 : f32 to vector<16x128xf32>
      %552 = arith.mulf %533, %551 : vector<16x128xf32>
      %553 = arith.addf %523, %552 : vector<16x128xf32>
      %c89 = arith.constant 89 : index
      %554 = memref.load %arg2[%c89] : memref<98xf32, #tpu.memory_space<smem>>
      %555 = vector.broadcast %554 : f32 to vector<16x128xf32>
      %556 = arith.mulf %533, %555 : vector<16x128xf32>
      %557 = arith.addf %527, %556 : vector<16x128xf32>
      %c90 = arith.constant 90 : index
      %558 = memref.load %arg2[%c90] : memref<98xf32, #tpu.memory_space<smem>>
      %559 = vector.broadcast %558 : f32 to vector<16x128xf32>
      %560 = arith.mulf %533, %559 : vector<16x128xf32>
      %561 = arith.addf %531, %560 : vector<16x128xf32>
      %c1_203 = arith.constant 1 : index
      %c6_204 = arith.constant 6 : index
      %c0_205 = arith.constant 0 : index
      %562 = vector.load %arg6[%c1_203, %c6_204, %c0_205] : memref<2x24x128xf32, #tpu.memory_space<vmem>>, vector<1x16x128xf32>
      %563 = vector.shape_cast %562 : vector<1x16x128xf32> to vector<16x128xf32>
      %c91 = arith.constant 91 : index
      %564 = memref.load %arg2[%c91] : memref<98xf32, #tpu.memory_space<smem>>
      %565 = vector.broadcast %564 : f32 to vector<16x128xf32>
      %566 = arith.mulf %563, %565 : vector<16x128xf32>
      %567 = arith.addf %537, %566 : vector<16x128xf32>
      %c92 = arith.constant 92 : index
      %568 = memref.load %arg2[%c92] : memref<98xf32, #tpu.memory_space<smem>>
      %569 = vector.broadcast %568 : f32 to vector<16x128xf32>
      %570 = arith.mulf %563, %569 : vector<16x128xf32>
      %571 = arith.addf %541, %570 : vector<16x128xf32>
      %c93 = arith.constant 93 : index
      %572 = memref.load %arg2[%c93] : memref<98xf32, #tpu.memory_space<smem>>
      %573 = vector.broadcast %572 : f32 to vector<16x128xf32>
      %574 = arith.mulf %563, %573 : vector<16x128xf32>
      %575 = arith.addf %545, %574 : vector<16x128xf32>
      %c94 = arith.constant 94 : index
      %576 = memref.load %arg2[%c94] : memref<98xf32, #tpu.memory_space<smem>>
      %577 = vector.broadcast %576 : f32 to vector<16x128xf32>
      %578 = arith.mulf %563, %577 : vector<16x128xf32>
      %579 = arith.addf %549, %578 : vector<16x128xf32>
      %c95 = arith.constant 95 : index
      %580 = memref.load %arg2[%c95] : memref<98xf32, #tpu.memory_space<smem>>
      %581 = vector.broadcast %580 : f32 to vector<16x128xf32>
      %582 = arith.mulf %563, %581 : vector<16x128xf32>
      %583 = arith.addf %553, %582 : vector<16x128xf32>
      %c96_206 = arith.constant 96 : index
      %584 = memref.load %arg2[%c96_206] : memref<98xf32, #tpu.memory_space<smem>>
      %585 = vector.broadcast %584 : f32 to vector<16x128xf32>
      %586 = arith.mulf %563, %585 : vector<16x128xf32>
      %587 = arith.addf %557, %586 : vector<16x128xf32>
      %c97 = arith.constant 97 : index
      %588 = memref.load %arg2[%c97] : memref<98xf32, #tpu.memory_space<smem>>
      %589 = vector.broadcast %588 : f32 to vector<16x128xf32>
      %590 = arith.mulf %563, %589 : vector<16x128xf32>
      %591 = arith.addf %561, %590 : vector<16x128xf32>
      %592 = vector.extract_strided_slice %567 {offsets = [0, 0], sizes = [16, 16], strides = [1, 1]} : vector<16x128xf32> to vector<16x16xf32>
      %593 = vector.extract_strided_slice %571 {offsets = [0, 1], sizes = [16, 16], strides = [1, 1]} : vector<16x128xf32> to vector<16x16xf32>
      %594 = arith.addf %592, %593 : vector<16x16xf32>
      %595 = vector.extract_strided_slice %575 {offsets = [0, 2], sizes = [16, 16], strides = [1, 1]} : vector<16x128xf32> to vector<16x16xf32>
      %596 = arith.addf %594, %595 : vector<16x16xf32>
      %597 = vector.extract_strided_slice %579 {offsets = [0, 3], sizes = [16, 16], strides = [1, 1]} : vector<16x128xf32> to vector<16x16xf32>
      %598 = arith.addf %596, %597 : vector<16x16xf32>
      %599 = vector.extract_strided_slice %583 {offsets = [0, 4], sizes = [16, 16], strides = [1, 1]} : vector<16x128xf32> to vector<16x16xf32>
      %600 = arith.addf %598, %599 : vector<16x16xf32>
      %601 = vector.extract_strided_slice %587 {offsets = [0, 5], sizes = [16, 16], strides = [1, 1]} : vector<16x128xf32> to vector<16x16xf32>
      %602 = arith.addf %600, %601 : vector<16x16xf32>
      %603 = vector.extract_strided_slice %591 {offsets = [0, 6], sizes = [16, 16], strides = [1, 1]} : vector<16x128xf32> to vector<16x16xf32>
      %604 = arith.addf %602, %603 : vector<16x16xf32>
      %605 = arith.negf %604 : vector<16x16xf32>
      %606 = math.exp %605 : vector<16x16xf32>
      %cst_207 = arith.constant 1.000000e+00 : f32
      %607 = vector.broadcast %cst_207 : f32 to vector<16x16xf32>
      %608 = arith.addf %607, %606 : vector<16x16xf32>
      %609 = arith.divf %607, %608 : vector<16x16xf32>
      %c0_208 = arith.constant 0 : index
      %c0_209 = arith.constant 0 : index
      %c0_210 = arith.constant 0 : index
      %c0_211 = arith.constant 0 : index
      %610 = vector.load %arg4[%c0_208, %c0_209, %c0_210, %c0_211] : memref<1x1x16x16xf32, #tpu.memory_space<vmem>>, vector<1x1x16x16xf32>
      %611 = vector.shape_cast %610 : vector<1x1x16x16xf32> to vector<16x16xf32>
      %612 = vector.shape_cast %609 : vector<16x16xf32> to vector<1x1x16x16xf32>
      tpu.vector_store %arg4[%c0_208, %c0_209, %c0_210, %c0_211], %612 {strides = array<i32>} : memref<1x1x16x16xf32, #tpu.memory_space<vmem>>, vector<1x1x16x16xf32>,
    } else {
    }
    return
  }
  func.func @transform_0(%arg0: i32, %arg1: i32) -> i32 {
    %c0_i32 = arith.constant 0 : i32
    %c0_i32_0 = arith.constant 0 : i32
    return %c0_i32 : i32
  }
  func.func @transform_1(%arg0: i32, %arg1: i32) -> (i32, i32, i32) {
    %c0_i32 = arith.constant 0 : i32
    %c0_i32_0 = arith.constant 0 : i32
    return %arg0, %arg1, %c0_i32 : i32, i32, i32
  }
  func.func @transform_2(%arg0: i32, %arg1: i32) -> (i32, i32, i32, i32) {
    %c0_i32 = arith.constant 0 : i32
    %c0_i32_0 = arith.constant 0 : i32
    %c0_i32_1 = arith.constant 0 : i32
    %c0_i32_2 = arith.constant 0 : i32
    return %arg0, %c0_i32, %c0_i32_0, %c0_i32_1 : i32, i32, i32, i32
  }
}

</mosaic_0001>

<llo_original>
// kernel: tpu_custom_call.1
$region0: #{tpu_custom_call.1}
  #allocation0 [shape = 'u32[]', space=smem, size = 0x4, offset = 0x4, fixed_abs, tag = 'smem constant byte address 0x4 - core index']
  #allocation1 [shape = 'u32[144,128]{1,0:T(1,128)}', space=vmem, size = 0x12000, scoped, tag = 'internal scratch']
  #allocation2 [shape = 'f32[2,256]{1,0:T(2,128)}', space=vmem, size = 0x800, scoped, tag = 'scratch operand']
  #allocation3 [shape = 'f32[2,24,128]{2,1,0:T(8,128)}', space=vmem, size = 0x6000, scoped, tag = 'scratch operand']
  %s0 = inlined_call_operand.hbm [shape: f32[98], index: 0, kind: input, shape index: {}]
  %s1 = inlined_call_operand.hbm [shape: f32[2,4,256], index: 1, kind: input, shape index: {}]
  %s2 = inlined_call_operand.hbm [shape: f32[2,1,16,16], index: 2, kind: output, shape index: {}]
  %s3 = sld [smem:[#allocation0]]
  $region61: #{tpu_custom_call.1} parent=0
    _
  %s5 = ssub.s32 1, %s3
  %s6 = scalar_select 0, %s5, %s3
  $region1: #{tpu_custom_call.1} parent=0
    #allocation4 [shape = 'u8[512]{0}', space=smem, size = 0x200, scoped, tag = 'input window, operand 0, single buffered']
    #allocation5 [shape = 's32[2]{0}', space=sflag, size = 0x8, scoped, tag = 'scoped memory for tpu_custom_call.1']
    #allocation6 [shape = 's32[2]{0}', space=sflag, size = 0x8, scoped, tag = 'scoped memory for tpu_custom_call.1']
    #allocation7 [shape = 's32[2]{0}', space=sflag, size = 0x8, scoped, tag = 'scoped memory for tpu_custom_call.1']
    #allocation8 [shape = 'u8[8192]{0}', space=vmem, size = 0x2000, scoped, tag = 'input window, operand 1']
    #allocation9 [shape = 'u8[16384]{0}', space=vmem, size = 0x4000, scoped, tag = 'output window, operand 0']
    %7 = vsyncpa [#allocation7], 0
    %8 = vsyncpa [#allocation5], 0
    %s9 = scalar_lea.sflag [#allocation5], 1
    %10 = vsyncpa %s9, 0
    %11 = vsyncpa [#allocation6], 0
    %s12 = scalar_lea.sflag [#allocation6], 1
    %13 = vsyncpa %s12, 0
    loop: start=0, step=1, limit=4
    $region2: #{tpu_custom_call.1} parent=1 // loop_pre_header
      _
    $region3: #{tpu_custom_call.1} parent=1 // loop_header
      %s15 = sphi 0, %s19
      %p16 = scmp.ge.s32.totalorder %s15, 4
      %s22 = sphi 0, %s34
      %s23 = sphi 0, %s30
      %s24 = sphi 0, %s22
      %s25 = sphi 0, %s23
      %s26 = sphi 0, %s24
      %s27 = sphi 0, %s25
      %s35 = sphi 0, %s35
      %s37 = sphi 0, %s35
      %s38 = sphi 0, %s37
      %s52 = sphi 0, %s38
      %s60 = sphi 0, %s62
      %s63 = sphi 0, %s60
      %s64 = sphi 0, %s63
      %s80 = sphi 0, %s64
      %s86 = sphi 0, %s88
      %s89 = sphi 0, %s86
      %s90 = sphi 0, %s89
      %s106 = sphi 0, %s90
    $region4: #{tpu_custom_call.1} parent=1 // loop_header_branch
      %18 = sbr.rel (%p16) target = $region8
    $region5: #{tpu_custom_call.1} parent=1 // loop_body
      %s20 = ssub.s32 %s15, 1
      %s21 = ssub.s32 %s15, 2
      %s28 = sadd.s32 1, %s23
      %p29 = scmp.ge.s32.totalorder %s28, 1
      %s30 = scalar_select %p29, 0, %s28
      %s31 = sadd.s32 1, %s22
      %s32 = scalar_select %p29, %s31, %s22
      %p33 = scmp.ge.s32.totalorder %s32, 2
      %s34 = scalar_select %p33, 0, %s32
      %s36 = sadd.s32 %s35, 1
      %p39 = scmp.eq.s32.totalorder %s15, 1
      %p40 = scmp.ne.s32.totalorder %s35, %s37
      %p41 = scmp.eq.s32.totalorder %s15, 0
      %p42 = por %p40, %p41
      %p43 = scmp.ne.s32.totalorder %s35, %s37
      %p44 = scmp.eq.s32.totalorder %s20, 1
      %p45 = por %p43, %p44
      %p46 = scmp.ne.s32.totalorder %s37, %s38
      %p47 = scmp.eq.s32.totalorder %s20, 0
      %p48 = por %p46, %p47
      %p49 = scmp.ne.s32.totalorder %s37, %s38
      %p50 = scmp.eq.s32.totalorder %s21, 1
      %p51 = por %p49, %p50
      %p53 = scmp.ne.s32.totalorder %s38, %s52
      %p54 = scmp.eq.s32.totalorder %s21, 0
      %p55 = por %p53, %p54
      %s56 = ssub.s32 %s22, %s34
      %s57 = ssub.s32 %s23, %s30
      %s58 = sor.u32 %s56, %s57
      %p59 = scmp.eq.s32.totalorder %s58, 0
      %s61 = sadd.s32 %s60, 1
      %s62 = scalar_select %p59, %s60, %s61
      %p65 = pneg %p59
      %p66 = scmp.eq.s32.totalorder %s15, 1
      %p67 = por %p65, %p66
      %p68 = scmp.ne.s32.totalorder %s60, %s63
      %p69 = scmp.eq.s32.totalorder %s15, 0
      %p70 = por %p68, %p69
      %p71 = scmp.ne.s32.totalorder %s60, %s63
      %p72 = scmp.eq.s32.totalorder %s20, 1
      %p73 = por %p71, %p72
      %p74 = scmp.ne.s32.totalorder %s63, %s64
      %p75 = scmp.eq.s32.totalorder %s20, 0
      %p76 = por %p74, %p75
      %p77 = scmp.ne.s32.totalorder %s63, %s64
      %p78 = scmp.eq.s32.totalorder %s21, 1
      %p79 = por %p77, %p78
      %p81 = scmp.ne.s32.totalorder %s64, %s80
      %p82 = scmp.eq.s32.totalorder %s21, 0
      %p83 = por %p81, %p82
      %s84 = ssub.s32 %s22, %s34
      %p85 = scmp.eq.s32.totalorder %s84, 0
      %s87 = sadd.s32 %s86, 1
      %s88 = scalar_select %p85, %s86, %s87
      %p91 = pneg %p85
      %p92 = scmp.eq.s32.totalorder %s15, 1
      %p93 = por %p91, %p92
      %p94 = scmp.ne.s32.totalorder %s86, %s89
      %p95 = scmp.eq.s32.totalorder %s15, 0
      %p96 = por %p94, %p95
      %p97 = scmp.ne.s32.totalorder %s86, %s89
      %p98 = scmp.eq.s32.totalorder %s20, 1
      %p99 = por %p97, %p98
      %p100 = scmp.ne.s32.totalorder %s89, %s90
      %p101 = scmp.eq.s32.totalorder %s20, 0
      %p102 = por %p100, %p101
      %p103 = scmp.ne.s32.totalorder %s89, %s90
      %p104 = scmp.eq.s32.totalorder %s21, 1
      %p105 = por %p103, %p104
      %p107 = scmp.ne.s32.totalorder %s90, %s106
      %p108 = scmp.eq.s32.totalorder %s21, 0
      %p109 = por %p107, %p108
      %p110 = scmp.le.s32.totalorder 1, %s15
      %p111 = scmp.lt.s32.totalorder %s15, 3
      %p112 = pnand %p110, %p111
      %p113 = pneg %p112
      // Predicated region
      $region9: #{tpu_custom_call.1} parent=5 // pred_check
        _
      $region10: #{tpu_custom_call.1} parent=5 // pred_check_branch
        %115 = sbr.rel (%p112) target = $region12
      $region11: #{tpu_custom_call.1} parent=5 // pred_region
        %s116 = ssub.s32 %s15, 1
        // Predicated region
        $region13: #{tpu_custom_call.1} parent=11 // pred_check
          %p117 = pneg %p48
        $region14: #{tpu_custom_call.1} parent=11 // pred_check_branch
          %119 = sbr.rel (%p117) target = $region16
        $region15: #{tpu_custom_call.1} parent=11 // pred_region
          %s121 = ssub.s32 16, 16
          %122 = vsyncadd [#allocation7], %s121
          %125 = dma.hbm_to_smem %s0, 16, [#allocation4], [#allocation7]
        $region16: #{tpu_custom_call.1} parent=11 // pred_fallthru
          _
      $region12: #{tpu_custom_call.1} parent=5 // pred_fallthru
        _
      %p126 = scmp.lt.s32.totalorder %s15, 2
      // Predicated region
      $region17: #{tpu_custom_call.1} parent=5 // pred_check
        %p127 = pneg %p126
      $region18: #{tpu_custom_call.1} parent=5 // pred_check_branch
        %129 = sbr.rel (%p127) target = $region20
      $region19: #{tpu_custom_call.1} parent=5 // pred_region
        // Predicated region
        $region21: #{tpu_custom_call.1} parent=19 // pred_check
          %p130 = pneg %p70
        $region22: #{tpu_custom_call.1} parent=19 // pred_check_branch
          %132 = sbr.rel (%p130) target = $region24
        $region23: #{tpu_custom_call.1} parent=19 // pred_region
          %s133 = sand.u32 %s60, 1
          %s134 = scalar_lea.sflag [#allocation5], %s133
          %s135 = sand.u32 %s60, 1
          %s136 = smul.addr %s135, 8
          %s137 = scalar_lea.vmem [#allocation8], %s136
          %s139 = ssub.s32 128, 128
          %140 = vsyncadd %s134, %s139
          %s141 = smul.addr %s23, 2
          %s142 = smul.addr %s22, 2
          %s143 = sadd.s32 %s141, %s142
          %s144 = smul.addr %s143, 64
          %s145 = scalar_lea.hbm %s1, %s144
          %s147 = sshll.u32 %s137, 4
          %s148 = int_to_ptr.vmem [resolvable:$true] %s147
          %150 = dma.hbm_to_vmem [thread:$0]  %s145, 128, %s148, %s134
        $region24: #{tpu_custom_call.1} parent=19 // pred_fallthru
          _
      $region20: #{tpu_custom_call.1} parent=5 // pred_fallthru
        _
      %p151 = scmp.le.s32.totalorder 1, %s15
      %p152 = scmp.lt.s32.totalorder %s15, 3
      %p153 = pnand %p151, %p152
      %p154 = pneg %p153
      // Predicated region
      $region25: #{tpu_custom_call.1} parent=5 // pred_check
        _
      $region26: #{tpu_custom_call.1} parent=5 // pred_check_branch
        %156 = sbr.rel (%p153) target = $region28
      $region27: #{tpu_custom_call.1} parent=5 // pred_region
        %s157 = ssub.s32 %s15, 1
        // Predicated region
        $region29: #{tpu_custom_call.1} parent=27 // pred_check
          %p158 = pneg %p48
        $region30: #{tpu_custom_call.1} parent=27 // pred_check_branch
          %160 = sbr.rel (%p158) target = $region32
        $region31: #{tpu_custom_call.1} parent=27 // pred_region
          %161 = dma.done [#allocation7], 16
        $region32: #{tpu_custom_call.1} parent=27 // pred_fallthru
          _
        %s162 = sand.u32 %s63, 1
        %s163 = scalar_lea.sflag [#allocation5], %s162
        %s164 = sand.u32 %s63, 1
        %s165 = smul.addr %s164, 8
        %s166 = scalar_lea.vmem [#allocation8], %s165
        // Predicated region
        $region33: #{tpu_custom_call.1} parent=27 // pred_check
          %p167 = pneg %p76
        $region34: #{tpu_custom_call.1} parent=27 // pred_check_branch
          %169 = sbr.rel (%p167) target = $region36
        $region35: #{tpu_custom_call.1} parent=27 // pred_region
          %170 = dma.done %s163, 128
        $region36: #{tpu_custom_call.1} parent=27 // pred_fallthru
          _
        %171 = sfence
        %p172 = pneg %p48
        %p173 = pneg %p45
        %s174 = sand.u32 %s63, 1
        %s175 = scalar_lea.sflag [#allocation5], %s174
        %s176 = sand.u32 %s63, 1
        %s177 = smul.addr %s176, 8
        %s178 = scalar_lea.vmem [#allocation8], %s177
        %p179 = pneg %p76
        %p180 = pneg %p73
        %p181 = pneg %p102
        %p182 = pneg %p99
        %s183 = sand.u32 %s89, 1
        %s184 = scalar_lea.sflag [#allocation6], %s183
        %s185 = sand.u32 %s89, 1
        %s186 = smul.addr %s185, 16
        %s187 = scalar_lea.vmem [#allocation9], %s186
        %v188 = vld [vmem:[%s166] sm:$0xff]
        %v190 = vcombine.high %v188, %v188
        %vm192 = vcmask 1043456
        %v193 = vsel %vm192, %v188, 0.0
        %v194 = vrot.slane %v193, 4
        %v195 = vadd.f32 %v193, %v194
        %v196 = vrot.slane %v195, 2
        %v197 = vadd.f32 %v195, %v196
        %v198 = vrot.slane %v197, 1
        %v199 = vadd.f32 %v197, %v198
        %v200 = vsel %vm192, %v190, 0.0
        %v201 = vrot.slane %v200, 4
        %v202 = vadd.f32 %v200, %v201
        %v203 = vrot.slane %v202, 2
        %v204 = vadd.f32 %v202, %v203
        %v205 = vrot.slane %v204, 1
        %v206 = vadd.f32 %v204, %v205
        %v207 = vsel %vm192, %v188, -inf
        %v208 = vrot.slane %v207, 4
        %v209 = vmax.f32 %v207, %v208
        %v210 = vrot.slane %v209, 2
        %v211 = vmax.f32 %v209, %v210
        %v212 = vrot.slane %v211, 1
        %v213 = vmax.f32 %v211, %v212
        %v214 = vsel %vm192, %v190, -inf
        %v215 = vrot.slane %v214, 4
        %v216 = vmax.f32 %v214, %v215
        %v217 = vrot.slane %v216, 2
        %v218 = vmax.f32 %v216, %v217
        %v219 = vrot.slane %v218, 1
        %v220 = vmax.f32 %v218, %v219
        %p221 = scmp.eq.s32.totalorder %s25, 0
        // Predicated region
        $region37: #{tpu_custom_call.1} parent=27 // pred_check
          %p222 = pneg %p221
        $region38: #{tpu_custom_call.1} parent=27 // pred_check_branch
          %224 = sbr.rel (%p222) target = $region40
        $region39: #{tpu_custom_call.1} parent=27 // pred_region
          %225 = vst [vmem:[#allocation3] sm:$0xff] 0.0
          %226 = vst [vmem:[#allocation3 + $0x8] sm:$0xff] 0.0
          %227 = vst [vmem:[#allocation3 + $0x10] sm:$0xff] 0.0
          %228 = vst [vmem:[#allocation3 + $0x18] sm:$0xff] 0.0
          %229 = vst [vmem:[#allocation3 + $0x20] sm:$0xff] 0.0
          %230 = vst [vmem:[#allocation3 + $0x28] sm:$0xff] 0.0
          %v233 = vcombine.low %v199, %v206
          %v235 = vunpack.c.l.s4 1966171168
          %v236 = vunpack.c.0.s8 %v235
          %v237 = vlaneseq
          %v238 = vshrl.u32 %v237, 7
          %v239 = vsub.s32 %v236, %v238
          %v240 = vrot.slane %v233, %v239
          %v242 = vunpack.c.l.s4 1966171168
          %v243 = vunpack.c.0.s8 %v242
          %v244 = vlaneseq
          %v245 = vshrl.u32 %v244, 7
          %v246 = vsub.s32 %v243, %v245
          %v247 = vrot.slane %v240, %v246
          %v249 = vlaneseq
          %vm250 = vcmp.ge.s32.totalorder %v249, 0
          %vm251 = vcmp.lt.s32.totalorder %v249, 256
          %vm252 = vmand %vm250, %vm251
          %253 = vst.msk [vmem:[#allocation2] ss:$2 sm:$0x3] %vm252, %v247
          %v256 = vcombine.low %v213, %v220
          %v258 = vunpack.c.l.s4 1966171168
          %v259 = vunpack.c.0.s8 %v258
          %v260 = vlaneseq
          %v261 = vshrl.u32 %v260, 7
          %v262 = vsub.s32 %v259, %v261
          %v263 = vrot.slane %v256, %v262
          %v265 = vunpack.c.l.s4 1966171168
          %v266 = vunpack.c.0.s8 %v265
          %v267 = vlaneseq
          %v268 = vshrl.u32 %v267, 7
          %v269 = vsub.s32 %v266, %v268
          %v270 = vrot.slane %v263, %v269
          %s272 = scalar_lea.vmem [#allocation2], 1
          %273 = vst.msk [vmem:[%s272] ss:$2 sm:$0x3] %vm252, %v270
        $region40: #{tpu_custom_call.1} parent=27 // pred_fallthru
          _
        %p274 = scmp.gt.s32.totalorder %s25, 0
        // Predicated region
        $region41: #{tpu_custom_call.1} parent=27 // pred_check
          %p275 = pneg %p274
        $region42: #{tpu_custom_call.1} parent=27 // pred_check_branch
          %277 = sbr.rel (%p275) target = $region44
        $region43: #{tpu_custom_call.1} parent=27 // pred_region
          %v278 = vld [vmem:[#allocation2] ss:$2 sm:$0x3]
          %v281 = vcombine.low %v199, %v206
          %v283 = vunpack.c.l.s4 1966171168
          %v284 = vunpack.c.0.s8 %v283
          %v285 = vlaneseq
          %v286 = vshrl.u32 %v285, 7
          %v287 = vsub.s32 %v284, %v286
          %v288 = vrot.slane %v281, %v287
          %v290 = vunpack.c.l.s4 1966171168
          %v291 = vunpack.c.0.s8 %v290
          %v292 = vlaneseq
          %v293 = vshrl.u32 %v292, 7
          %v294 = vsub.s32 %v291, %v293
          %v295 = vrot.slane %v288, %v294
          %v297 = vadd.f32 %v278, %v295
          %v298 = vlaneseq
          %vm299 = vcmp.ge.s32.totalorder %v298, 0
          %vm300 = vcmp.lt.s32.totalorder %v298, 256
          %vm301 = vmand %vm299, %vm300
          %302 = vst.msk [vmem:[#allocation2] ss:$2 sm:$0x3] %vm301, %v297
          %s303 = scalar_lea.vmem [#allocation2], 1
          %v304 = vld [vmem:[%s303] ss:$2 sm:$0x3]
          %v307 = vcombine.low %v213, %v220
          %v309 = vunpack.c.l.s4 1966171168
          %v310 = vunpack.c.0.s8 %v309
          %v311 = vlaneseq
          %v312 = vshrl.u32 %v311, 7
          %v313 = vsub.s32 %v310, %v312
          %v314 = vrot.slane %v307, %v313
          %v316 = vunpack.c.l.s4 1966171168
          %v317 = vunpack.c.0.s8 %v316
          %v318 = vlaneseq
          %v319 = vshrl.u32 %v318, 7
          %v320 = vsub.s32 %v317, %v319
          %v321 = vrot.slane %v314, %v320
          %v323 = vmax.f32 %v304, %v321
          %324 = vst.msk [vmem:[%s303] ss:$2 sm:$0x3] %vm301, %v323
        $region44: #{tpu_custom_call.1} parent=27 // pred_fallthru
          _
        // Predicated region
        $region45: #{tpu_custom_call.1} parent=27 // pred_check
          %p325 = pneg %p221
        $region46: #{tpu_custom_call.1} parent=27 // pred_check_branch
          %327 = sbr.rel (%p325) target = $region48
        $region47: #{tpu_custom_call.1} parent=27 // pred_region
          %v328 = vld [vmem:[#allocation2] ss:$2 sm:$0x3]
          %v329 = vmul.f32 %v328, 0.25
          %v330 = vlaneseq
          %vm331 = vcmp.ge.s32.totalorder %v330, 0
          %vm332 = vcmp.lt.s32.totalorder %v330, 256
          %vm333 = vmand %vm331, %vm332
          %334 = vst.msk [vmem:[#allocation2] ss:$2 sm:$0x3] %vm333, %v329
          %v335 = vld [vmem:[#allocation2] sm:$0x1]
          %v337 = vlaneseq
          %v338 = vshrl.u32 %v337, 7
          %v339 = vsub.s32 0, %v338
          %v340 = vrot.slane %v335, %v339
          %341 = vrot.lane.b32.xlu0 %v340, 3
          %v342 = vpop.permute.xlu0 %341
          %vm344 = vcmask 147480
          %345 = vst.msk [vmem:[#allocation3 + $0x3] sm:$0x1] %vm344, %v342
          %v346 = vld [vmem:[#allocation2 + $0x1] sm:$0x1]
          %v348 = vlaneseq
          %v349 = vshrl.u32 %v348, 7
          %v350 = vsub.s32 0, %v349
          %v351 = vrot.slane %v346, %v350
          %352 = vrot.lane.b32.xlu0 %v351, 3
          %v353 = vpop.permute.xlu0 %352
          %s355 = scalar_lea.vmem [#allocation3], 24
          %356 = vst.msk [vmem:[%s355 + $0x3] sm:$0x1] %vm344, %v353
          %v357 = vld [vmem:[#allocation2] sm:$0x1]
          %v359 = vlaneseq
          %v360 = vshrl.u32 %v359, 7
          %v361 = vsub.s32 0, %v360
          %v362 = vrot.slane %v357, %v361
          %363 = vrot.lane.b32.xlu0 %v362, 115
          %v364 = vpop.permute.xlu0 %363
          %366 = vst.msk [vmem:[#allocation3 + $0x4] sm:$0x1] %vm344, %v364
          %v367 = vld [vmem:[#allocation2 + $0x1] sm:$0x1]
          %v369 = vlaneseq
          %v370 = vshrl.u32 %v369, 7
          %v371 = vsub.s32 0, %v370
          %v372 = vrot.slane %v367, %v371
          %373 = vrot.lane.b32.xlu0 %v372, 115
          %v374 = vpop.permute.xlu0 %373
          %376 = vst.msk [vmem:[%s355 + $0x4] sm:$0x1] %vm344, %v374
          %v377 = vld [vmem:[#allocation2] sm:$0x1]
          %v379 = vlaneseq
          %v380 = vshrl.u32 %v379, 7
          %v381 = vsub.s32 0, %v380
          %v382 = vrot.slane %v377, %v381
          %383 = vrot.lane.b32.xlu0 %v382, 99
          %v384 = vpop.permute.xlu0 %383
          %386 = vst.msk [vmem:[#allocation3 + $0x5] sm:$0x1] %vm344, %v384
          %v387 = vld [vmem:[#allocation2 + $0x1] sm:$0x1]
          %v389 = vlaneseq
          %v390 = vshrl.u32 %v389, 7
          %v391 = vsub.s32 0, %v390
          %v392 = vrot.slane %v387, %v391
          %393 = vrot.lane.b32.xlu0 %v392, 99
          %v394 = vpop.permute.xlu0 %393
          %396 = vst.msk [vmem:[%s355 + $0x5] sm:$0x1] %vm344, %v394
          %v397 = vld [vmem:[#allocation2] sm:$0x1]
          %v399 = vlaneseq
          %v400 = vshrl.u32 %v399, 7
          %v401 = vsub.s32 0, %v400
          %v402 = vrot.slane %v397, %v401
          %403 = vrot.lane.b32.xlu0 %v402, 83
          %v404 = vpop.permute.xlu0 %403
          %406 = vst.msk [vmem:[#allocation3 + $0x6] sm:$0x1] %vm344, %v404
          %v407 = vld [vmem:[#allocation2 + $0x1] sm:$0x1]
          %v409 = vlaneseq
          %v410 = vshrl.u32 %v409, 7
          %v411 = vsub.s32 0, %v410
          %v412 = vrot.slane %v407, %v411
          %413 = vrot.lane.b32.xlu0 %v412, 83
          %v414 = vpop.permute.xlu0 %413
          %416 = vst.msk [vmem:[%s355 + $0x6] sm:$0x1] %vm344, %v414
          %v417 = vld [vmem:[#allocation2] sm:$0x1]
          %v419 = vlaneseq
          %v420 = vshrl.u32 %v419, 7
          %v421 = vsub.s32 0, %v420
          %v422 = vrot.slane %v417, %v421
          %423 = vrot.lane.b32.xlu0 %v422, 67
          %v424 = vpop.permute.xlu0 %423
          %426 = vst.msk [vmem:[#allocation3 + $0x7] sm:$0x1] %vm344, %v424
          %v427 = vld [vmem:[#allocation2 + $0x1] sm:$0x1]
          %v429 = vlaneseq
          %v430 = vshrl.u32 %v429, 7
          %v431 = vsub.s32 0, %v430
          %v432 = vrot.slane %v427, %v431
          %433 = vrot.lane.b32.xlu0 %v432, 67
          %v434 = vpop.permute.xlu0 %433
          %436 = vst.msk [vmem:[%s355 + $0x7] sm:$0x1] %vm344, %v434
          %v437 = vld [vmem:[#allocation2] sm:$0x1]
          %v439 = vlaneseq
          %v440 = vshrl.u32 %v439, 7
          %v441 = vsub.s32 0, %v440
          %v442 = vrot.slane %v437, %v441
          %443 = vrot.lane.b32.xlu0 %v442, 51
          %v444 = vpop.permute.xlu0 %443
          %446 = vst.msk [vmem:[#allocation3 + $0x8] sm:$0x1] %vm344, %v444
          %v447 = vld [vmem:[#allocation2 + $0x1] sm:$0x1]
          %v449 = vlaneseq
          %v450 = vshrl.u32 %v449, 7
          %v451 = vsub.s32 0, %v450
          %v452 = vrot.slane %v447, %v451
          %453 = vrot.lane.b32.xlu0 %v452, 51
          %v454 = vpop.permute.xlu0 %453
          %456 = vst.msk [vmem:[%s355 + $0x8] sm:$0x1] %vm344, %v454
          %v457 = vld [vmem:[#allocation2] sm:$0x1]
          %v459 = vlaneseq
          %v460 = vshrl.u32 %v459, 7
          %v461 = vsub.s32 0, %v460
          %v462 = vrot.slane %v457, %v461
          %463 = vrot.lane.b32.xlu0 %v462, 35
          %v464 = vpop.permute.xlu0 %463
          %466 = vst.msk [vmem:[#allocation3 + $0x9] sm:$0x1] %vm344, %v464
          %v467 = vld [vmem:[#allocation2 + $0x1] sm:$0x1]
          %v469 = vlaneseq
          %v470 = vshrl.u32 %v469, 7
          %v471 = vsub.s32 0, %v470
          %v472 = vrot.slane %v467, %v471
          %473 = vrot.lane.b32.xlu0 %v472, 35
          %v474 = vpop.permute.xlu0 %473
          %476 = vst.msk [vmem:[%s355 + $0x9] sm:$0x1] %vm344, %v474
          %v477 = vld [vmem:[#allocation2] sm:$0x1]
          %v479 = vlaneseq
          %v480 = vshrl.u32 %v479, 7
          %v481 = vsub.s32 0, %v480
          %v482 = vrot.slane %v477, %v481
          %483 = vrot.lane.b32.xlu0 %v482, 19
          %v484 = vpop.permute.xlu0 %483
          %486 = vst.msk [vmem:[#allocation3 + $0xa] sm:$0x1] %vm344, %v484
          %v487 = vld [vmem:[#allocation2 + $0x1] sm:$0x1]
          %v489 = vlaneseq
          %v490 = vshrl.u32 %v489, 7
          %v491 = vsub.s32 0, %v490
          %v492 = vrot.slane %v487, %v491
          %493 = vrot.lane.b32.xlu0 %v492, 19
          %v494 = vpop.permute.xlu0 %493
          %496 = vst.msk [vmem:[%s355 + $0xa] sm:$0x1] %vm344, %v494
          %v497 = vld [vmem:[#allocation2 + $0x2] sm:$0x1]
          %v499 = vlaneseq
          %v500 = vshrl.u32 %v499, 7
          %v501 = vsub.s32 0, %v500
          %v502 = vrot.slane %v497, %v501
          %503 = vrot.lane.b32.xlu0 %v502, 3
          %v504 = vpop.permute.xlu0 %503
          %506 = vst.msk [vmem:[#allocation3 + $0xb] sm:$0x1] %vm344, %v504
          %v507 = vld [vmem:[#allocation2 + $0x3] sm:$0x1]
          %v509 = vlaneseq
          %v510 = vshrl.u32 %v509, 7
          %v511 = vsub.s32 0, %v510
          %v512 = vrot.slane %v507, %v511
          %513 = vrot.lane.b32.xlu0 %v512, 3
          %v514 = vpop.permute.xlu0 %513
          %516 = vst.msk [vmem:[%s355 + $0xb] sm:$0x1] %vm344, %v514
          %v517 = vld [vmem:[#allocation2 + $0x2] sm:$0x1]
          %v519 = vlaneseq
          %v520 = vshrl.u32 %v519, 7
          %v521 = vsub.s32 0, %v520
          %v522 = vrot.slane %v517, %v521
          %523 = vrot.lane.b32.xlu0 %v522, 115
          %v524 = vpop.permute.xlu0 %523
          %526 = vst.msk [vmem:[#allocation3 + $0xc] sm:$0x1] %vm344, %v524
          %v527 = vld [vmem:[#allocation2 + $0x3] sm:$0x1]
          %v529 = vlaneseq
          %v530 = vshrl.u32 %v529, 7
          %v531 = vsub.s32 0, %v530
          %v532 = vrot.slane %v527, %v531
          %533 = vrot.lane.b32.xlu0 %v532, 115
          %v534 = vpop.permute.xlu0 %533
          %536 = vst.msk [vmem:[%s355 + $0xc] sm:$0x1] %vm344, %v534
          %v537 = vld [vmem:[#allocation2 + $0x2] sm:$0x1]
          %v539 = vlaneseq
          %v540 = vshrl.u32 %v539, 7
          %v541 = vsub.s32 0, %v540
          %v542 = vrot.slane %v537, %v541
          %543 = vrot.lane.b32.xlu0 %v542, 99
          %v544 = vpop.permute.xlu0 %543
          %546 = vst.msk [vmem:[#allocation3 + $0xd] sm:$0x1] %vm344, %v544
          %v547 = vld [vmem:[#allocation2 + $0x3] sm:$0x1]
          %v549 = vlaneseq
          %v550 = vshrl.u32 %v549, 7
          %v551 = vsub.s32 0, %v550
          %v552 = vrot.slane %v547, %v551
          %553 = vrot.lane.b32.xlu0 %v552, 99
          %v554 = vpop.permute.xlu0 %553
          %556 = vst.msk [vmem:[%s355 + $0xd] sm:$0x1] %vm344, %v554
          %v557 = vld [vmem:[#allocation2 + $0x2] sm:$0x1]
          %v559 = vlaneseq
          %v560 = vshrl.u32 %v559, 7
          %v561 = vsub.s32 0, %v560
          %v562 = vrot.slane %v557, %v561
          %563 = vrot.lane.b32.xlu0 %v562, 83
          %v564 = vpop.permute.xlu0 %563
          %566 = vst.msk [vmem:[#allocation3 + $0xe] sm:$0x1] %vm344, %v564
          %v567 = vld [vmem:[#allocation2 + $0x3] sm:$0x1]
          %v569 = vlaneseq
          %v570 = vshrl.u32 %v569, 7
          %v571 = vsub.s32 0, %v570
          %v572 = vrot.slane %v567, %v571
          %573 = vrot.lane.b32.xlu0 %v572, 83
          %v574 = vpop.permute.xlu0 %573
          %576 = vst.msk [vmem:[%s355 + $0xe] sm:$0x1] %vm344, %v574
          %v577 = vld [vmem:[#allocation2 + $0x2] sm:$0x1]
          %v579 = vlaneseq
          %v580 = vshrl.u32 %v579, 7
          %v581 = vsub.s32 0, %v580
          %v582 = vrot.slane %v577, %v581
          %583 = vrot.lane.b32.xlu0 %v582, 67
          %v584 = vpop.permute.xlu0 %583
          %586 = vst.msk [vmem:[#allocation3 + $0xf] sm:$0x1] %vm344, %v584
          %v587 = vld [vmem:[#allocation2 + $0x3] sm:$0x1]
          %v589 = vlaneseq
          %v590 = vshrl.u32 %v589, 7
          %v591 = vsub.s32 0, %v590
          %v592 = vrot.slane %v587, %v591
          %593 = vrot.lane.b32.xlu0 %v592, 67
          %v594 = vpop.permute.xlu0 %593
          %596 = vst.msk [vmem:[%s355 + $0xf] sm:$0x1] %vm344, %v594
          %v597 = vld [vmem:[#allocation2 + $0x2] sm:$0x1]
          %v599 = vlaneseq
          %v600 = vshrl.u32 %v599, 7
          %v601 = vsub.s32 0, %v600
          %v602 = vrot.slane %v597, %v601
          %603 = vrot.lane.b32.xlu0 %v602, 51
          %v604 = vpop.permute.xlu0 %603
          %606 = vst.msk [vmem:[#allocation3 + $0x10] sm:$0x1] %vm344, %v604
          %v607 = vld [vmem:[#allocation2 + $0x3] sm:$0x1]
          %v609 = vlaneseq
          %v610 = vshrl.u32 %v609, 7
          %v611 = vsub.s32 0, %v610
          %v612 = vrot.slane %v607, %v611
          %613 = vrot.lane.b32.xlu0 %v612, 51
          %v614 = vpop.permute.xlu0 %613
          %616 = vst.msk [vmem:[%s355 + $0x10] sm:$0x1] %vm344, %v614
          %v617 = vld [vmem:[#allocation2 + $0x2] sm:$0x1]
          %v619 = vlaneseq
          %v620 = vshrl.u32 %v619, 7
          %v621 = vsub.s32 0, %v620
          %v622 = vrot.slane %v617, %v621
          %623 = vrot.lane.b32.xlu0 %v622, 35
          %v624 = vpop.permute.xlu0 %623
          %626 = vst.msk [vmem:[#allocation3 + $0x11] sm:$0x1] %vm344, %v624
          %v627 = vld [vmem:[#allocation2 + $0x3] sm:$0x1]
          %v629 = vlaneseq
          %v630 = vshrl.u32 %v629, 7
          %v631 = vsub.s32 0, %v630
          %v632 = vrot.slane %v627, %v631
          %633 = vrot.lane.b32.xlu0 %v632, 35
          %v634 = vpop.permute.xlu0 %633
          %636 = vst.msk [vmem:[%s355 + $0x11] sm:$0x1] %vm344, %v634
          %v637 = vld [vmem:[#allocation2 + $0x2] sm:$0x1]
          %v639 = vlaneseq
          %v640 = vshrl.u32 %v639, 7
          %v641 = vsub.s32 0, %v640
          %v642 = vrot.slane %v637, %v641
          %643 = vrot.lane.b32.xlu0 %v642, 19
          %v644 = vpop.permute.xlu0 %643
          %646 = vst.msk [vmem:[#allocation3 + $0x12] sm:$0x1] %vm344, %v644
          %v647 = vld [vmem:[#allocation2 + $0x3] sm:$0x1]
          %v649 = vlaneseq
          %v650 = vshrl.u32 %v649, 7
          %v651 = vsub.s32 0, %v650
          %v652 = vrot.slane %v647, %v651
          %653 = vrot.lane.b32.xlu0 %v652, 19
          %v654 = vpop.permute.xlu0 %653
          %656 = vst.msk [vmem:[%s355 + $0x12] sm:$0x1] %vm344, %v654
          %v657 = vld [vmem:[#allocation3] sm:$0xff]
          %v658 = vld [vmem:[#allocation3 + $0x8] sm:$0xff]
          %s659 = sld [smem:[#allocation4]]
          %v660 = vstv %s659
          %v661 = vmul.f32 %v657, %v660
          %v662 = vmul.f32 %v658, %v660
          %s663 = sld [smem:[#allocation4 + $0x1]]
          %v664 = vstv %s663
          %v665 = vmul.f32 %v657, %v664
          %v666 = vmul.f32 %v658, %v664
          %s667 = sld [smem:[#allocation4 + $0x2]]
          %v668 = vstv %s667
          %v669 = vmul.f32 %v657, %v668
          %v670 = vmul.f32 %v658, %v668
          %s671 = sld [smem:[#allocation4 + $0x3]]
          %v672 = vstv %s671
          %v673 = vmul.f32 %v657, %v672
          %v674 = vmul.f32 %v658, %v672
          %s675 = sld [smem:[#allocation4 + $0x4]]
          %v676 = vstv %s675
          %v677 = vmul.f32 %v657, %v676
          %v678 = vmul.f32 %v658, %v676
          %s679 = sld [smem:[#allocation4 + $0x5]]
          %v680 = vstv %s679
          %v681 = vmul.f32 %v657, %v680
          %v682 = vmul.f32 %v658, %v680
          %s683 = sld [smem:[#allocation4 + $0x6]]
          %v684 = vstv %s683
          %v685 = vmul.f32 %v657, %v684
          %v686 = vmul.f32 %v658, %v684
          %v687 = vld [vmem:[#allocation3 + $0x1] sm:$0xff]
          %v688 = vld [vmem:[#allocation3 + $0x9] sm:$0xff]
          %s689 = sld [smem:[#allocation4 + $0x7]]
          %v690 = vstv %s689
          %v691 = vmul.f32 %v687, %v690
          %v692 = vmul.f32 %v688, %v690
          %v693 = vadd.f32 %v661, %v691
          %v694 = vadd.f32 %v662, %v692
          %s695 = sld [smem:[#allocation4 + $0x8]]
          %v696 = vstv %s695
          %v697 = vmul.f32 %v687, %v696
          %v698 = vmul.f32 %v688, %v696
          %v699 = vadd.f32 %v665, %v697
          %v700 = vadd.f32 %v666, %v698
          %s701 = sld [smem:[#allocation4 + $0x9]]
          %v702 = vstv %s701
          %v703 = vmul.f32 %v687, %v702
          %v704 = vmul.f32 %v688, %v702
          %v705 = vadd.f32 %v669, %v703
          %v706 = vadd.f32 %v670, %v704
          %s707 = sld [smem:[#allocation4 + $0xa]]
          %v708 = vstv %s707
          %v709 = vmul.f32 %v687, %v708
          %v710 = vmul.f32 %v688, %v708
          %v711 = vadd.f32 %v673, %v709
          %v712 = vadd.f32 %v674, %v710
          %s713 = sld [smem:[#allocation4 + $0xb]]
          %v714 = vstv %s713
          %v715 = vmul.f32 %v687, %v714
          %v716 = vmul.f32 %v688, %v714
          %v717 = vadd.f32 %v677, %v715
          %v718 = vadd.f32 %v678, %v716
          %s719 = sld [smem:[#allocation4 + $0xc]]
          %v720 = vstv %s719
          %v721 = vmul.f32 %v687, %v720
          %v722 = vmul.f32 %v688, %v720
          %v723 = vadd.f32 %v681, %v721
          %v724 = vadd.f32 %v682, %v722
          %s725 = sld [smem:[#allocation4 + $0xd]]
          %v726 = vstv %s725
          %v727 = vmul.f32 %v687, %v726
          %v728 = vmul.f32 %v688, %v726
          %v729 = vadd.f32 %v685, %v727
          %v730 = vadd.f32 %v686, %v728
          %v731 = vld [vmem:[#allocation3 + $0x2] sm:$0xff]
          %v732 = vld [vmem:[#allocation3 + $0xa] sm:$0xff]
          %s733 = sld [smem:[#allocation4 + $0xe]]
          %v734 = vstv %s733
          %v735 = vmul.f32 %v731, %v734
          %v736 = vmul.f32 %v732, %v734
          %v737 = vadd.f32 %v693, %v735
          %v738 = vadd.f32 %v694, %v736
          %s739 = sld [smem:[#allocation4 + $0xf]]
          %v740 = vstv %s739
          %v741 = vmul.f32 %v731, %v740
          %v742 = vmul.f32 %v732, %v740
          %v743 = vadd.f32 %v699, %v741
          %v744 = vadd.f32 %v700, %v742
          %s745 = sld [smem:[#allocation4 + $0x10]]
          %v746 = vstv %s745
          %v747 = vmul.f32 %v731, %v746
          %v748 = vmul.f32 %v732, %v746
          %v749 = vadd.f32 %v705, %v747
          %v750 = vadd.f32 %v706, %v748
          %s751 = sld [smem:[#allocation4 + $0x11]]
          %v752 = vstv %s751
          %v753 = vmul.f32 %v731, %v752
          %v754 = vmul.f32 %v732, %v752
          %v755 = vadd.f32 %v711, %v753
          %v756 = vadd.f32 %v712, %v754
          %s757 = sld [smem:[#allocation4 + $0x12]]
          %v758 = vstv %s757
          %v759 = vmul.f32 %v731, %v758
          %v760 = vmul.f32 %v732, %v758
          %v761 = vadd.f32 %v717, %v759
          %v762 = vadd.f32 %v718, %v760
          %s763 = sld [smem:[#allocation4 + $0x13]]
          %v764 = vstv %s763
          %v765 = vmul.f32 %v731, %v764
          %v766 = vmul.f32 %v732, %v764
          %v767 = vadd.f32 %v723, %v765
          %v768 = vadd.f32 %v724, %v766
          %s769 = sld [smem:[#allocation4 + $0x14]]
          %v770 = vstv %s769
          %v771 = vmul.f32 %v731, %v770
          %v772 = vmul.f32 %v732, %v770
          %v773 = vadd.f32 %v729, %v771
          %v774 = vadd.f32 %v730, %v772
          %v775 = vld [vmem:[#allocation3 + $0x3] sm:$0xff]
          %v776 = vld [vmem:[#allocation3 + $0xb] sm:$0xff]
          %s777 = sld [smem:[#allocation4 + $0x15]]
          %v778 = vstv %s777
          %v779 = vmul.f32 %v775, %v778
          %v780 = vmul.f32 %v776, %v778
          %v781 = vadd.f32 %v737, %v779
          %v782 = vadd.f32 %v738, %v780
          %s783 = sld [smem:[#allocation4 + $0x16]]
          %v784 = vstv %s783
          %v785 = vmul.f32 %v775, %v784
          %v786 = vmul.f32 %v776, %v784
          %v787 = vadd.f32 %v743, %v785
          %v788 = vadd.f32 %v744, %v786
          %s789 = sld [smem:[#allocation4 + $0x17]]
          %v790 = vstv %s789
          %v791 = vmul.f32 %v775, %v790
          %v792 = vmul.f32 %v776, %v790
          %v793 = vadd.f32 %v749, %v791
          %v794 = vadd.f32 %v750, %v792
          %s795 = sld [smem:[#allocation4 + $0x18]]
          %v796 = vstv %s795
          %v797 = vmul.f32 %v775, %v796
          %v798 = vmul.f32 %v776, %v796
          %v799 = vadd.f32 %v755, %v797
          %v800 = vadd.f32 %v756, %v798
          %s801 = sld [smem:[#allocation4 + $0x19]]
          %v802 = vstv %s801
          %v803 = vmul.f32 %v775, %v802
          %v804 = vmul.f32 %v776, %v802
          %v805 = vadd.f32 %v761, %v803
          %v806 = vadd.f32 %v762, %v804
          %s807 = sld [smem:[#allocation4 + $0x1a]]
          %v808 = vstv %s807
          %v809 = vmul.f32 %v775, %v808
          %v810 = vmul.f32 %v776, %v808
          %v811 = vadd.f32 %v767, %v809
          %v812 = vadd.f32 %v768, %v810
          %s813 = sld [smem:[#allocation4 + $0x1b]]
          %v814 = vstv %s813
          %v815 = vmul.f32 %v775, %v814
          %v816 = vmul.f32 %v776, %v814
          %v817 = vadd.f32 %v773, %v815
          %v818 = vadd.f32 %v774, %v816
          %v819 = vld [vmem:[#allocation3 + $0x4] sm:$0xff]
          %v820 = vld [vmem:[#allocation3 + $0xc] sm:$0xff]
          %s821 = sld [smem:[#allocation4 + $0x1c]]
          %v822 = vstv %s821
          %v823 = vmul.f32 %v819, %v822
          %v824 = vmul.f32 %v820, %v822
          %v825 = vadd.f32 %v781, %v823
          %v826 = vadd.f32 %v782, %v824
          %s827 = sld [smem:[#allocation4 + $0x1d]]
          %v828 = vstv %s827
          %v829 = vmul.f32 %v819, %v828
          %v830 = vmul.f32 %v820, %v828
          %v831 = vadd.f32 %v787, %v829
          %v832 = vadd.f32 %v788, %v830
          %s833 = sld [smem:[#allocation4 + $0x1e]]
          %v834 = vstv %s833
          %v835 = vmul.f32 %v819, %v834
          %v836 = vmul.f32 %v820, %v834
          %v837 = vadd.f32 %v793, %v835
          %v838 = vadd.f32 %v794, %v836
          %s839 = sld [smem:[#allocation4 + $0x1f]]
          %v840 = vstv %s839
          %v841 = vmul.f32 %v819, %v840
          %v842 = vmul.f32 %v820, %v840
          %v843 = vadd.f32 %v799, %v841
          %v844 = vadd.f32 %v800, %v842
          %s845 = sld [smem:[#allocation4 + $0x20]]
          %v846 = vstv %s845
          %v847 = vmul.f32 %v819, %v846
          %v848 = vmul.f32 %v820, %v846
          %v849 = vadd.f32 %v805, %v847
          %v850 = vadd.f32 %v806, %v848
          %s851 = sld [smem:[#allocation4 + $0x21]]
          %v852 = vstv %s851
          %v853 = vmul.f32 %v819, %v852
          %v854 = vmul.f32 %v820, %v852
          %v855 = vadd.f32 %v811, %v853
          %v856 = vadd.f32 %v812, %v854
          %s857 = sld [smem:[#allocation4 + $0x22]]
          %v858 = vstv %s857
          %v859 = vmul.f32 %v819, %v858
          %v860 = vmul.f32 %v820, %v858
          %v861 = vadd.f32 %v817, %v859
          %v862 = vadd.f32 %v818, %v860
          %v863 = vld [vmem:[#allocation3 + $0x5] sm:$0xff]
          %v864 = vld [vmem:[#allocation3 + $0xd] sm:$0xff]
          %s865 = sld [smem:[#allocation4 + $0x23]]
          %v866 = vstv %s865
          %v867 = vmul.f32 %v863, %v866
          %v868 = vmul.f32 %v864, %v866
          %v869 = vadd.f32 %v825, %v867
          %v870 = vadd.f32 %v826, %v868
          %s871 = sld [smem:[#allocation4 + $0x24]]
          %v872 = vstv %s871
          %v873 = vmul.f32 %v863, %v872
          %v874 = vmul.f32 %v864, %v872
          %v875 = vadd.f32 %v831, %v873
          %v876 = vadd.f32 %v832, %v874
          %s877 = sld [smem:[#allocation4 + $0x25]]
          %v878 = vstv %s877
          %v879 = vmul.f32 %v863, %v878
          %v880 = vmul.f32 %v864, %v878
          %v881 = vadd.f32 %v837, %v879
          %v882 = vadd.f32 %v838, %v880
          %s883 = sld [smem:[#allocation4 + $0x26]]
          %v884 = vstv %s883
          %v885 = vmul.f32 %v863, %v884
          %v886 = vmul.f32 %v864, %v884
          %v887 = vadd.f32 %v843, %v885
          %v888 = vadd.f32 %v844, %v886
          %s889 = sld [smem:[#allocation4 + $0x27]]
          %v890 = vstv %s889
          %v891 = vmul.f32 %v863, %v890
          %v892 = vmul.f32 %v864, %v890
          %v893 = vadd.f32 %v849, %v891
          %v894 = vadd.f32 %v850, %v892
          %s895 = sld [smem:[#allocation4 + $0x28]]
          %v896 = vstv %s895
          %v897 = vmul.f32 %v863, %v896
          %v898 = vmul.f32 %v864, %v896
          %v899 = vadd.f32 %v855, %v897
          %v900 = vadd.f32 %v856, %v898
          %s901 = sld [smem:[#allocation4 + $0x29]]
          %v902 = vstv %s901
          %v903 = vmul.f32 %v863, %v902
          %v904 = vmul.f32 %v864, %v902
          %v905 = vadd.f32 %v861, %v903
          %v906 = vadd.f32 %v862, %v904
          %v907 = vld [vmem:[#allocation3 + $0x6] sm:$0xff]
          %v908 = vld [vmem:[#allocation3 + $0xe] sm:$0xff]
          %s909 = sld [smem:[#allocation4 + $0x2a]]
          %v910 = vstv %s909
          %v911 = vmul.f32 %v907, %v910
          %v912 = vmul.f32 %v908, %v910
          %v913 = vadd.f32 %v869, %v911
          %v914 = vadd.f32 %v870, %v912
          %s915 = sld [smem:[#allocation4 + $0x2b]]
          %v916 = vstv %s915
          %v917 = vmul.f32 %v907, %v916
          %v918 = vmul.f32 %v908, %v916
          %v919 = vadd.f32 %v875, %v917
          %v920 = vadd.f32 %v876, %v918
          %s921 = sld [smem:[#allocation4 + $0x2c]]
          %v922 = vstv %s921
          %v923 = vmul.f32 %v907, %v922
          %v924 = vmul.f32 %v908, %v922
          %v925 = vadd.f32 %v881, %v923
          %v926 = vadd.f32 %v882, %v924
          %s927 = sld [smem:[#allocation4 + $0x2d]]
          %v928 = vstv %s927
          %v929 = vmul.f32 %v907, %v928
          %v930 = vmul.f32 %v908, %v928
          %v931 = vadd.f32 %v887, %v929
          %v932 = vadd.f32 %v888, %v930
          %s933 = sld [smem:[#allocation4 + $0x2e]]
          %v934 = vstv %s933
          %v935 = vmul.f32 %v907, %v934
          %v936 = vmul.f32 %v908, %v934
          %v937 = vadd.f32 %v893, %v935
          %v938 = vadd.f32 %v894, %v936
          %s939 = sld [smem:[#allocation4 + $0x2f]]
          %v940 = vstv %s939
          %v941 = vmul.f32 %v907, %v940
          %v942 = vmul.f32 %v908, %v940
          %v943 = vadd.f32 %v899, %v941
          %v944 = vadd.f32 %v900, %v942
          %s945 = sld [smem:[#allocation4 + $0x30]]
          %v946 = vstv %s945
          %v947 = vmul.f32 %v907, %v946
          %v948 = vmul.f32 %v908, %v946
          %v949 = vadd.f32 %v905, %v947
          %v950 = vadd.f32 %v906, %v948
          %v951 = vld [vmem:[%s355] sm:$0xff]
          %v952 = vld [vmem:[%s355 + $0x8] sm:$0xff]
          %s953 = sld [smem:[#allocation4 + $0x31]]
          %v954 = vstv %s953
          %v955 = vmul.f32 %v951, %v954
          %v956 = vmul.f32 %v952, %v954
          %v957 = vadd.f32 %v913, %v955
          %v958 = vadd.f32 %v914, %v956
          %s959 = sld [smem:[#allocation4 + $0x32]]
          %v960 = vstv %s959
          %v961 = vmul.f32 %v951, %v960
          %v962 = vmul.f32 %v952, %v960
          %v963 = vadd.f32 %v919, %v961
          %v964 = vadd.f32 %v920, %v962
          %s965 = sld [smem:[#allocation4 + $0x33]]
          %v966 = vstv %s965
          %v967 = vmul.f32 %v951, %v966
          %v968 = vmul.f32 %v952, %v966
          %v969 = vadd.f32 %v925, %v967
          %v970 = vadd.f32 %v926, %v968
          %s971 = sld [smem:[#allocation4 + $0x34]]
          %v972 = vstv %s971
          %v973 = vmul.f32 %v951, %v972
          %v974 = vmul.f32 %v952, %v972
          %v975 = vadd.f32 %v931, %v973
          %v976 = vadd.f32 %v932, %v974
          %s977 = sld [smem:[#allocation4 + $0x35]]
          %v978 = vstv %s977
          %v979 = vmul.f32 %v951, %v978
          %v980 = vmul.f32 %v952, %v978
          %v981 = vadd.f32 %v937, %v979
          %v982 = vadd.f32 %v938, %v980
          %s983 = sld [smem:[#allocation4 + $0x36]]
          %v984 = vstv %s983
          %v985 = vmul.f32 %v951, %v984
          %v986 = vmul.f32 %v952, %v984
          %v987 = vadd.f32 %v943, %v985
          %v988 = vadd.f32 %v944, %v986
          %s989 = sld [smem:[#allocation4 + $0x37]]
          %v990 = vstv %s989
          %v991 = vmul.f32 %v951, %v990
          %v992 = vmul.f32 %v952, %v990
          %v993 = vadd.f32 %v949, %v991
          %v994 = vadd.f32 %v950, %v992
          %v995 = vld [vmem:[%s355 + $0x1] sm:$0xff]
          %v996 = vld [vmem:[%s355 + $0x9] sm:$0xff]
          %s997 = sld [smem:[#allocation4 + $0x38]]
          %v998 = vstv %s997
          %v999 = vmul.f32 %v995, %v998
          %v1000 = vmul.f32 %v996, %v998
          %v1001 = vadd.f32 %v957, %v999
          %v1002 = vadd.f32 %v958, %v1000
          %s1003 = sld [smem:[#allocation4 + $0x39]]
          %v1004 = vstv %s1003
          %v1005 = vmul.f32 %v995, %v1004
          %v1006 = vmul.f32 %v996, %v1004
          %v1007 = vadd.f32 %v963, %v1005
          %v1008 = vadd.f32 %v964, %v1006
          %s1009 = sld [smem:[#allocation4 + $0x3a]]
          %v1010 = vstv %s1009
          %v1011 = vmul.f32 %v995, %v1010
          %v1012 = vmul.f32 %v996, %v1010
          %v1013 = vadd.f32 %v969, %v1011
          %v1014 = vadd.f32 %v970, %v1012
          %s1015 = sld [smem:[#allocation4 + $0x3b]]
          %v1016 = vstv %s1015
          %v1017 = vmul.f32 %v995, %v1016
          %v1018 = vmul.f32 %v996, %v1016
          %v1019 = vadd.f32 %v975, %v1017
          %v1020 = vadd.f32 %v976, %v1018
          %s1021 = sld [smem:[#allocation4 + $0x3c]]
          %v1022 = vstv %s1021
          %v1023 = vmul.f32 %v995, %v1022
          %v1024 = vmul.f32 %v996, %v1022
          %v1025 = vadd.f32 %v981, %v1023
          %v1026 = vadd.f32 %v982, %v1024
          %s1027 = sld [smem:[#allocation4 + $0x3d]]
          %v1028 = vstv %s1027
          %v1029 = vmul.f32 %v995, %v1028
          %v1030 = vmul.f32 %v996, %v1028
          %v1031 = vadd.f32 %v987, %v1029
          %v1032 = vadd.f32 %v988, %v1030
          %s1033 = sld [smem:[#allocation4 + $0x3e]]
          %v1034 = vstv %s1033
          %v1035 = vmul.f32 %v995, %v1034
          %v1036 = vmul.f32 %v996, %v1034
          %v1037 = vadd.f32 %v993, %v1035
          %v1038 = vadd.f32 %v994, %v1036
          %v1039 = vld [vmem:[%s355 + $0x2] sm:$0xff]
          %v1040 = vld [vmem:[%s355 + $0xa] sm:$0xff]
          %s1041 = sld [smem:[#allocation4 + $0x3f]]
          %v1042 = vstv %s1041
          %v1043 = vmul.f32 %v1039, %v1042
          %v1044 = vmul.f32 %v1040, %v1042
          %v1045 = vadd.f32 %v1001, %v1043
          %v1046 = vadd.f32 %v1002, %v1044
          %s1047 = sld [smem:[#allocation4 + $0x40]]
          %v1048 = vstv %s1047
          %v1049 = vmul.f32 %v1039, %v1048
          %v1050 = vmul.f32 %v1040, %v1048
          %v1051 = vadd.f32 %v1007, %v1049
          %v1052 = vadd.f32 %v1008, %v1050
          %s1053 = sld [smem:[#allocation4 + $0x41]]
          %v1054 = vstv %s1053
          %v1055 = vmul.f32 %v1039, %v1054
          %v1056 = vmul.f32 %v1040, %v1054
          %v1057 = vadd.f32 %v1013, %v1055
          %v1058 = vadd.f32 %v1014, %v1056
          %s1059 = sld [smem:[#allocation4 + $0x42]]
          %v1060 = vstv %s1059
          %v1061 = vmul.f32 %v1039, %v1060
          %v1062 = vmul.f32 %v1040, %v1060
          %v1063 = vadd.f32 %v1019, %v1061
          %v1064 = vadd.f32 %v1020, %v1062
          %s1065 = sld [smem:[#allocation4 + $0x43]]
          %v1066 = vstv %s1065
          %v1067 = vmul.f32 %v1039, %v1066
          %v1068 = vmul.f32 %v1040, %v1066
          %v1069 = vadd.f32 %v1025, %v1067
          %v1070 = vadd.f32 %v1026, %v1068
          %s1071 = sld [smem:[#allocation4 + $0x44]]
          %v1072 = vstv %s1071
          %v1073 = vmul.f32 %v1039, %v1072
          %v1074 = vmul.f32 %v1040, %v1072
          %v1075 = vadd.f32 %v1031, %v1073
          %v1076 = vadd.f32 %v1032, %v1074
          %s1077 = sld [smem:[#allocation4 + $0x45]]
          %v1078 = vstv %s1077
          %v1079 = vmul.f32 %v1039, %v1078
          %v1080 = vmul.f32 %v1040, %v1078
          %v1081 = vadd.f32 %v1037, %v1079
          %v1082 = vadd.f32 %v1038, %v1080
          %v1083 = vld [vmem:[%s355 + $0x3] sm:$0xff]
          %v1084 = vld [vmem:[%s355 + $0xb] sm:$0xff]
          %s1085 = sld [smem:[#allocation4 + $0x46]]
          %v1086 = vstv %s1085
          %v1087 = vmul.f32 %v1083, %v1086
          %v1088 = vmul.f32 %v1084, %v1086
          %v1089 = vadd.f32 %v1045, %v1087
          %v1090 = vadd.f32 %v1046, %v1088
          %s1091 = sld [smem:[#allocation4 + $0x47]]
          %v1092 = vstv %s1091
          %v1093 = vmul.f32 %v1083, %v1092
          %v1094 = vmul.f32 %v1084, %v1092
          %v1095 = vadd.f32 %v1051, %v1093
          %v1096 = vadd.f32 %v1052, %v1094
          %s1097 = sld [smem:[#allocation4 + $0x48]]
          %v1098 = vstv %s1097
          %v1099 = vmul.f32 %v1083, %v1098
          %v1100 = vmul.f32 %v1084, %v1098
          %v1101 = vadd.f32 %v1057, %v1099
          %v1102 = vadd.f32 %v1058, %v1100
          %s1103 = sld [smem:[#allocation4 + $0x49]]
          %v1104 = vstv %s1103
          %v1105 = vmul.f32 %v1083, %v1104
          %v1106 = vmul.f32 %v1084, %v1104
          %v1107 = vadd.f32 %v1063, %v1105
          %v1108 = vadd.f32 %v1064, %v1106
          %s1109 = sld [smem:[#allocation4 + $0x4a]]
          %v1110 = vstv %s1109
          %v1111 = vmul.f32 %v1083, %v1110
          %v1112 = vmul.f32 %v1084, %v1110
          %v1113 = vadd.f32 %v1069, %v1111
          %v1114 = vadd.f32 %v1070, %v1112
          %s1115 = sld [smem:[#allocation4 + $0x4b]]
          %v1116 = vstv %s1115
          %v1117 = vmul.f32 %v1083, %v1116
          %v1118 = vmul.f32 %v1084, %v1116
          %v1119 = vadd.f32 %v1075, %v1117
          %v1120 = vadd.f32 %v1076, %v1118
          %s1121 = sld [smem:[#allocation4 + $0x4c]]
          %v1122 = vstv %s1121
          %v1123 = vmul.f32 %v1083, %v1122
          %v1124 = vmul.f32 %v1084, %v1122
          %v1125 = vadd.f32 %v1081, %v1123
          %v1126 = vadd.f32 %v1082, %v1124
          %v1127 = vld [vmem:[%s355 + $0x4] sm:$0xff]
          %v1128 = vld [vmem:[%s355 + $0xc] sm:$0xff]
          %s1129 = sld [smem:[#allocation4 + $0x4d]]
          %v1130 = vstv %s1129
          %v1131 = vmul.f32 %v1127, %v1130
          %v1132 = vmul.f32 %v1128, %v1130
          %v1133 = vadd.f32 %v1089, %v1131
          %v1134 = vadd.f32 %v1090, %v1132
          %s1135 = sld [smem:[#allocation4 + $0x4e]]
          %v1136 = vstv %s1135
          %v1137 = vmul.f32 %v1127, %v1136
          %v1138 = vmul.f32 %v1128, %v1136
          %v1139 = vadd.f32 %v1095, %v1137
          %v1140 = vadd.f32 %v1096, %v1138
          %s1141 = sld [smem:[#allocation4 + $0x4f]]
          %v1142 = vstv %s1141
          %v1143 = vmul.f32 %v1127, %v1142
          %v1144 = vmul.f32 %v1128, %v1142
          %v1145 = vadd.f32 %v1101, %v1143
          %v1146 = vadd.f32 %v1102, %v1144
          %s1147 = sld [smem:[#allocation4 + $0x50]]
          %v1148 = vstv %s1147
          %v1149 = vmul.f32 %v1127, %v1148
          %v1150 = vmul.f32 %v1128, %v1148
          %v1151 = vadd.f32 %v1107, %v1149
          %v1152 = vadd.f32 %v1108, %v1150
          %s1153 = sld [smem:[#allocation4 + $0x51]]
          %v1154 = vstv %s1153
          %v1155 = vmul.f32 %v1127, %v1154
          %v1156 = vmul.f32 %v1128, %v1154
          %v1157 = vadd.f32 %v1113, %v1155
          %v1158 = vadd.f32 %v1114, %v1156
          %s1159 = sld [smem:[#allocation4 + $0x52]]
          %v1160 = vstv %s1159
          %v1161 = vmul.f32 %v1127, %v1160
          %v1162 = vmul.f32 %v1128, %v1160
          %v1163 = vadd.f32 %v1119, %v1161
          %v1164 = vadd.f32 %v1120, %v1162
          %s1165 = sld [smem:[#allocation4 + $0x53]]
          %v1166 = vstv %s1165
          %v1167 = vmul.f32 %v1127, %v1166
          %v1168 = vmul.f32 %v1128, %v1166
          %v1169 = vadd.f32 %v1125, %v1167
          %v1170 = vadd.f32 %v1126, %v1168
          %v1171 = vld [vmem:[%s355 + $0x5] sm:$0xff]
          %v1172 = vld [vmem:[%s355 + $0xd] sm:$0xff]
          %s1173 = sld [smem:[#allocation4 + $0x54]]
          %v1174 = vstv %s1173
          %v1175 = vmul.f32 %v1171, %v1174
          %v1176 = vmul.f32 %v1172, %v1174
          %v1177 = vadd.f32 %v1133, %v1175
          %v1178 = vadd.f32 %v1134, %v1176
          %s1179 = sld [smem:[#allocation4 + $0x55]]
          %v1180 = vstv %s1179
          %v1181 = vmul.f32 %v1171, %v1180
          %v1182 = vmul.f32 %v1172, %v1180
          %v1183 = vadd.f32 %v1139, %v1181
          %v1184 = vadd.f32 %v1140, %v1182
          %s1185 = sld [smem:[#allocation4 + $0x56]]
          %v1186 = vstv %s1185
          %v1187 = vmul.f32 %v1171, %v1186
          %v1188 = vmul.f32 %v1172, %v1186
          %v1189 = vadd.f32 %v1145, %v1187
          %v1190 = vadd.f32 %v1146, %v1188
          %s1191 = sld [smem:[#allocation4 + $0x57]]
          %v1192 = vstv %s1191
          %v1193 = vmul.f32 %v1171, %v1192
          %v1194 = vmul.f32 %v1172, %v1192
          %v1195 = vadd.f32 %v1151, %v1193
          %v1196 = vadd.f32 %v1152, %v1194
          %s1197 = sld [smem:[#allocation4 + $0x58]]
          %v1198 = vstv %s1197
          %v1199 = vmul.f32 %v1171, %v1198
          %v1200 = vmul.f32 %v1172, %v1198
          %v1201 = vadd.f32 %v1157, %v1199
          %v1202 = vadd.f32 %v1158, %v1200
          %s1203 = sld [smem:[#allocation4 + $0x59]]
          %v1204 = vstv %s1203
          %v1205 = vmul.f32 %v1171, %v1204
          %v1206 = vmul.f32 %v1172, %v1204
          %v1207 = vadd.f32 %v1163, %v1205
          %v1208 = vadd.f32 %v1164, %v1206
          %s1209 = sld [smem:[#allocation4 + $0x5a]]
          %v1210 = vstv %s1209
          %v1211 = vmul.f32 %v1171, %v1210
          %v1212 = vmul.f32 %v1172, %v1210
          %v1213 = vadd.f32 %v1169, %v1211
          %v1214 = vadd.f32 %v1170, %v1212
          %v1215 = vld [vmem:[%s355 + $0x6] sm:$0xff]
          %v1216 = vld [vmem:[%s355 + $0xe] sm:$0xff]
          %s1217 = sld [smem:[#allocation4 + $0x5b]]
          %v1218 = vstv %s1217
          %v1219 = vmul.f32 %v1215, %v1218
          %v1220 = vmul.f32 %v1216, %v1218
          %v1221 = vadd.f32 %v1177, %v1219
          %v1222 = vadd.f32 %v1178, %v1220
          %s1223 = sld [smem:[#allocation4 + $0x5c]]
          %v1224 = vstv %s1223
          %v1225 = vmul.f32 %v1215, %v1224
          %v1226 = vmul.f32 %v1216, %v1224
          %v1227 = vadd.f32 %v1183, %v1225
          %v1228 = vadd.f32 %v1184, %v1226
          %s1229 = sld [smem:[#allocation4 + $0x5d]]
          %v1230 = vstv %s1229
          %v1231 = vmul.f32 %v1215, %v1230
          %v1232 = vmul.f32 %v1216, %v1230
          %v1233 = vadd.f32 %v1189, %v1231
          %v1234 = vadd.f32 %v1190, %v1232
          %s1235 = sld [smem:[#allocation4 + $0x5e]]
          %v1236 = vstv %s1235
          %v1237 = vmul.f32 %v1215, %v1236
          %v1238 = vmul.f32 %v1216, %v1236
          %v1239 = vadd.f32 %v1195, %v1237
          %v1240 = vadd.f32 %v1196, %v1238
          %s1241 = sld [smem:[#allocation4 + $0x5f]]
          %v1242 = vstv %s1241
          %v1243 = vmul.f32 %v1215, %v1242
          %v1244 = vmul.f32 %v1216, %v1242
          %v1245 = vadd.f32 %v1201, %v1243
          %v1246 = vadd.f32 %v1202, %v1244
          %s1247 = sld [smem:[#allocation4 + $0x60]]
          %v1248 = vstv %s1247
          %v1249 = vmul.f32 %v1215, %v1248
          %v1250 = vmul.f32 %v1216, %v1248
          %v1251 = vadd.f32 %v1207, %v1249
          %v1252 = vadd.f32 %v1208, %v1250
          %s1253 = sld [smem:[#allocation4 + $0x61]]
          %v1254 = vstv %s1253
          %v1255 = vmul.f32 %v1215, %v1254
          %v1256 = vmul.f32 %v1216, %v1254
          %v1257 = vadd.f32 %v1213, %v1255
          %v1258 = vadd.f32 %v1214, %v1256
          %1261 = vrot.lane.b32.xlu0 %v1227, 127
          %v1262 = vpop.permute.xlu0 %1261
          %1263 = vrot.lane.b32.xlu0 %v1228, 127
          %v1264 = vpop.permute.xlu0 %1263
          %v1267 = vadd.f32 %v1221, %v1262
          %v1268 = vadd.f32 %v1222, %v1264
          %1271 = vrot.lane.b32.xlu0 %v1233, 126
          %v1272 = vpop.permute.xlu0 %1271
          %1273 = vrot.lane.b32.xlu0 %v1234, 126
          %v1274 = vpop.permute.xlu0 %1273
          %v1277 = vadd.f32 %v1267, %v1272
          %v1278 = vadd.f32 %v1268, %v1274
          %1281 = vrot.lane.b32.xlu0 %v1239, 125
          %v1282 = vpop.permute.xlu0 %1281
          %1283 = vrot.lane.b32.xlu0 %v1240, 125
          %v1284 = vpop.permute.xlu0 %1283
          %v1287 = vadd.f32 %v1277, %v1282
          %v1288 = vadd.f32 %v1278, %v1284
          %1291 = vrot.lane.b32.xlu0 %v1245, 124
          %v1292 = vpop.permute.xlu0 %1291
          %1293 = vrot.lane.b32.xlu0 %v1246, 124
          %v1294 = vpop.permute.xlu0 %1293
          %v1297 = vadd.f32 %v1287, %v1292
          %v1298 = vadd.f32 %v1288, %v1294
          %1301 = vrot.lane.b32.xlu0 %v1251, 123
          %v1302 = vpop.permute.xlu0 %1301
          %1303 = vrot.lane.b32.xlu0 %v1252, 123
          %v1304 = vpop.permute.xlu0 %1303
          %v1307 = vadd.f32 %v1297, %v1302
          %v1308 = vadd.f32 %v1298, %v1304
          %1311 = vrot.lane.b32.xlu0 %v1257, 122
          %v1312 = vpop.permute.xlu0 %1311
          %1313 = vrot.lane.b32.xlu0 %v1258, 122
          %v1314 = vpop.permute.xlu0 %1313
          %v1317 = vadd.f32 %v1307, %v1312
          %v1318 = vadd.f32 %v1308, %v1314
          %v1319 = vxor.u32 %v1317, 2147483648
          %v1320 = vxor.u32 %v1318, 2147483648
          %v1321 = vmul.f32 %v1319, 1.442695
          %v1322 = vpow.pop %v1321
          %v1323 = vmul.f32 %v1320, 1.442695
          %v1324 = vpow.pop %v1323
          %v1325 = vadd.f32 %v1322, 1.0
          %v1326 = vadd.f32 %v1324, 1.0
          %v1327 = vrcp.pop %v1325
          %v1328 = vmul.f32 1.0, %v1327
          %v1329 = vrcp.pop %v1326
          %v1330 = vmul.f32 1.0, %v1329
          %vm1331 = vcmask 130048
          %1332 = vst.msk [vmem:[%s187] sm:$0xff] %vm1331, %v1328
          %1333 = vst.msk [vmem:[%s187 + $0x8] sm:$0xff] %vm1331, %v1330
        $region48: #{tpu_custom_call.1} parent=27 // pred_fallthru
          _
        %s1334 = sand.u32 %s89, 1
        %s1335 = scalar_lea.sflag [#allocation6], %s1334
        %s1336 = sand.u32 %s89, 1
        %s1337 = smul.addr %s1336, 16
        %s1338 = scalar_lea.vmem [#allocation9], %s1337
        // Predicated region
        $region49: #{tpu_custom_call.1} parent=27 // pred_check
          %p1339 = pneg %p99
        $region50: #{tpu_custom_call.1} parent=27 // pred_check_branch
          %1341 = sbr.rel (%p1339) target = $region52
        $region51: #{tpu_custom_call.1} parent=27 // pred_region
          %s1343 = ssub.s32 256, 256
          %1344 = vsyncadd %s1335, %s1343
          %s1345 = smul.addr %s24, 2
          %s1346 = smul.addr %s1345, 128
          %s1347 = scalar_lea.hbm %s2, %s1346
          %s1348 = sshll.u32 %s1338, 4
          %s1349 = int_to_ptr.vmem [resolvable:$true] %s1348
          %1354 = dma.vmem_to_hbm [thread:$0]  %s1349, 256, %s1347, %s1335, 128, 128, 8
        $region52: #{tpu_custom_call.1} parent=27 // pred_fallthru
          _
      $region28: #{tpu_custom_call.1} parent=5 // pred_fallthru
        _
      %p1355 = scmp.le.s32.totalorder 2, %s15
      // Predicated region
      $region53: #{tpu_custom_call.1} parent=5 // pred_check
        %p1356 = pneg %p1355
      $region54: #{tpu_custom_call.1} parent=5 // pred_check_branch
        %1358 = sbr.rel (%p1356) target = $region56
      $region55: #{tpu_custom_call.1} parent=5 // pred_region
        %s1359 = ssub.s32 %s15, 2
        // Predicated region
        $region57: #{tpu_custom_call.1} parent=55 // pred_check
          %p1360 = pneg %p105
        $region58: #{tpu_custom_call.1} parent=55 // pred_check_branch
          %1362 = sbr.rel (%p1360) target = $region60
        $region59: #{tpu_custom_call.1} parent=55 // pred_region
          %s1363 = sand.u32 %s90, 1
          %s1364 = scalar_lea.sflag [#allocation6], %s1363
          %s1365 = sand.u32 %s90, 1
          %s1366 = smul.addr %s1365, 16
          %s1367 = scalar_lea.vmem [#allocation9], %s1366
          %1368 = dma.done %s1364, 256
        $region60: #{tpu_custom_call.1} parent=55 // pred_fallthru
          _
      $region56: #{tpu_custom_call.1} parent=5 // pred_fallthru
        _
    $region6: #{tpu_custom_call.1} parent=1 // loop_footer
      %s19 = sadd.s32 1, %s15
    $region7: #{tpu_custom_call.1} parent=1 // loop_footer_branch
      %14 = sbr.rel target = $region3
    $region8: #{tpu_custom_call.1} parent=1 // loop_exit
      _
    %1369 = vsyncpa [#allocation5], 1
    %s1370 = scalar_lea.sflag [#allocation5], 1
    %1371 = vsyncpa %s1370, 1
    %1372 = vsyncpa [#allocation6], 1
    %s1373 = scalar_lea.sflag [#allocation6], 1
    %1374 = vsyncpa %s1373, 1
    %1375 = vsyncpa [#allocation7], 1
    %s1376 = scalar_lea.sflag [#allocation7], 1
    %1377 = vsyncpa %s1376, 1

</llo_original>
